<compile_context>
chip_gen: v6e
topology: v6e:2x2x1
jax: 0.10.0
libtpu: 0.0.40
codegen_flags: <defaults>
</compile_context>

<pallas_src>
import functools

import jax
import jax.numpy as jnp
from jax import lax
from jax.experimental import pallas as pl
from jax.experimental.pallas import tpu as pltpu


def _round_up(x, m):
    return ((x + m - 1) // m) * m


def _ffn_kernel(x_ref, w1_ref, b1_ref, w2_ref, b2_ref, g_ref, beta_ref, o_ref,
                xn_ref, acc_ref, *, eps):
    k = pl.program_id(1)

    @pl.when(k == 0)
    def _():
        # Fused single-pass LayerNorm (E[x], E[x^2]) in f32; cached for all k.
        x = x_ref[...].astype(jnp.float32)
        inv_d = jnp.float32(1.0 / x.shape[-1])
        mean = jnp.sum(x, axis=-1, keepdims=True) * inv_d
        mean_sq = jnp.sum(x * x, axis=-1, keepdims=True) * inv_d
        var = mean_sq - mean * mean
        inv = lax.rsqrt(var + eps)
        g = g_ref[...].astype(jnp.float32)
        b = beta_ref[...].astype(jnp.float32)
        xn_ref[...] = (x - mean) * inv * g + b
        acc_ref[...] = jnp.zeros_like(acc_ref)

    # Hidden chunk k:  h_k = gelu(xn @ W1[:, k] + b1[k]);  acc += h_k @ W2[k, :]
    xn = xn_ref[...]
    h = jnp.dot(xn.astype(w1_ref.dtype), w1_ref[...],
                preferred_element_type=jnp.float32)
    h = h + b1_ref[...].astype(jnp.float32)
    # Exact erf-based GELU (matches torch.nn.functional.gelu default).
    h = 0.5 * h * (1.0 + lax.erf(h * jnp.float32(0.7071067811865476)))
    acc_ref[...] += jnp.dot(h.astype(w2_ref.dtype), w2_ref[...],
                            preferred_element_type=jnp.float32)

    @pl.when(k == pl.num_programs(1) - 1)
    def _():
        y = (acc_ref[...] + b2_ref[...].astype(jnp.float32)
             + x_ref[...].astype(jnp.float32))          # residual add
        o_ref[...] = y.astype(o_ref.dtype)


def positionwise_ffn(x, w1, b1, w2, b2, gamma, beta, *, eps=1e-6, tm=256,
                     vmem_budget_bytes=40 * 1024 * 1024):
    """x: [..., d_in]; w1: [d_in, d_hid]; w2: [d_hid, d_in] (transposed nn.Linear weights)."""
    orig_shape = x.shape
    d_in = orig_shape[-1]
    d_hid = w1.shape[1]
    assert w1.shape == (d_in, d_hid) and w2.shape == (d_hid, d_in)
    assert b1.shape == (d_hid,) and b2.shape == (d_in,)
    assert gamma.shape == (d_in,) and beta.shape == (d_in,)

    x2 = x.reshape(-1, d_in)
    T = x2.shape[0]

    # Large, row-aligned token tile; pad the token axis so the grid is exact.
    row_align = 8 if x2.dtype == jnp.float32 else 16
    tm_eff = max(row_align,
                 min(_round_up(tm, row_align), _round_up(T, row_align)))
    T_pad = _round_up(T, tm_eff)
    if T_pad != T:
        x2 = jnp.pad(x2, ((0, T_pad - T), (0, 0)))
    nt = T_pad // tm_eff

    w_bytes = jnp.dtype(w1.dtype).itemsize
    x_bytes = jnp.dtype(x2.dtype).itemsize

    def vmem_estimate(tk):
        nk_ = d_hid // tk
        nbuf_w = 1 if nk_ == 1 else 2
        weights = nbuf_w * w_bytes * (2 * d_in * tk + tk)   # w1 + w2 + b1 tiles
        consts = w_bytes * 3 * d_in                         # b2, gamma, beta
        io = 2 * tm_eff * d_in * 2 * x_bytes                # x + out (double buffered)
        scratch = 2 * tm_eff * d_in * 4                     # xn + acc (f32)
        hidden = tm_eff * tk * 4                            # h intermediate
        return weights + consts + io + scratch + hidden

    # Pick the biggest hidden-dim chunk that fits the VMEM budget (usually d_hid).
    candidates = sorted({c for c in (d_hid, 8192, 4096, 2048, 1024, 512, 256, 128)
                         if c <= d_hid and d_hid % c == 0}, reverse=True)
    tk = candidates[-1]
    for cand in candidates:
        if vmem_estimate(cand) <= vmem_budget_bytes:
            tk = cand
            break
    nk = d_hid // tk

    vmem_limit = int(min(max(vmem_estimate(tk) * 5 // 4 + (4 << 20), 32 << 20),
                         64 << 20))

    # (1, dim) rows for lane-aligned broadcast inside the kernel.
    b1r = b1.reshape(1, d_hid)
    b2r = b2.reshape(1, d_in)
    gr = gamma.reshape(1, d_in)
    br = beta.reshape(1, d_in)

    def build(single_buffer_consts):
        def spec(shape, imap, const=False):
            if const and single_buffer_consts:
                # Constant index_map -> nothing to prefetch; don't waste 2x VMEM.
                return pl.BlockSpec(shape, imap, pipeline_mode=pl.Buffered(1))
            return pl.BlockSpec(shape, imap)

        resident = (nk == 1)
        grid_spec = pltpu.PrefetchScalarGridSpec(
            num_scalar_prefetch=0,
            grid=(nt, nk),
            in_specs=[
                spec((tm_eff, d_in), lambda i, k: (i, 0)),                   # x tile
                spec((d_in, tk), lambda i, k: (0, k), const=resident),       # w1
                spec((1, tk), lambda i, k: (0, k), const=resident),          # b1
                spec((tk, d_in), lambda i, k: (k, 0), const=resident),       # w2
                spec((1, d_in), lambda i, k: (0, 0), const=True),            # b2
                spec((1, d_in), lambda i, k: (0, 0), const=True),            # gamma
                spec((1, d_in), lambda i, k: (0, 0), const=True),            # beta
            ],
            out_specs=pl.BlockSpec((tm_eff, d_in), lambda i, k: (i, 0)),
            scratch_shapes=[
                pltpu.VMEM((tm_eff, d_in), jnp.float32),   # normalized x (cached over k)
                pltpu.VMEM((tm_eff, d_in), jnp.float32),   # output accumulator
            ],
        )
        return pl.pallas_call(
            functools.partial(_ffn_kernel, eps=eps),
            out_shape=jax.ShapeDtypeStruct((T_pad, d_in), x.dtype),
            grid_spec=grid_spec,
            compiler_params=pltpu.CompilerParams(
                dimension_semantics=("parallel", "arbitrary"),
                vmem_limit_bytes=vmem_limit),
        )

    args = (x2, w1, b1r, w2, b2r, gr, br)
    try:
        out = jax.block_until_ready(build(True)(*args))
    except Exception:
        # Fallback for jax versions without BlockSpec pipeline_mode support.
        out = jax.block_until_ready(build(False)(*args))

    return out[:T].reshape(orig_shape)


def _reference(x, w1, b1, w2, b2, gamma, beta, eps=1e-6):
    xf = x.astype(jnp.float32)
    mean = jnp.mean(xf, axis=-1, keepdims=True)
    var = jnp.mean((xf - mean) ** 2, axis=-1, keepdims=True)
    xn = (xf - mean) * lax.rsqrt(var + eps) * gamma + beta
    h = jax.nn.gelu(xn @ w1.astype(jnp.float32) + b1, approximate=False)
    return (h @ w2.astype(jnp.float32) + b2 + xf).astype(x.dtype)


if __name__ == "__main__":
    key = jax.random.PRNGKey(0)
    kx, k1, k2, k3, k4, k5, k6 = jax.random.split(key, 7)

    # Small but lane-aligned shapes (d_in, d_hid multiples of 128).
    B, S, d_in, d_hid = 2, 64, 128, 256
    x = jax.random.normal(kx, (B, S, d_in), dtype=jnp.float32)
    # nn.Linear(d_in, d_hid).weight is (d_hid, d_in); we store the transpose.
    w1 = jax.random.normal(k1, (d_in, d_hid), dtype=jnp.float32) * (1.0 / d_in ** 0.5)
    b1 = jax.random.normal(k2, (d_hid,), dtype=jnp.float32) * 0.02
    w2 = jax.random.normal(k3, (d_hid, d_in), dtype=jnp.float32) * (1.0 / d_hid ** 0.5)
    b2 = jax.random.normal(k4, (d_in,), dtype=jnp.float32) * 0.02
    gamma = 1.0 + 0.1 * jax.random.normal(k5, (d_in,), dtype=jnp.float32)
    beta = 0.02 * jax.random.normal(k6, (d_in,), dtype=jnp.float32)

    out = positionwise_ffn(x, w1, b1, w2, b2, gamma, beta)
    out = jax.block_until_ready(out)
    ref = _reference(x, w1, b1, w2, b2, gamma, beta)
    assert jnp.allclose(out, ref, atol=5e-4, rtol=5e-4), "mismatch vs reference (small case)"

    # Second case: token count not a multiple of the tile (exercises padding)
    # and more than one token tile in the grid.
    B2, S2 = 3, 200                      # T = 600 -> tm_eff = 256, padded to 768
    x_big = jax.random.normal(kx, (B2, S2, d_in), dtype=jnp.float32)
    out2 = positionwise_ffn(x_big, w1, b1, w2, b2, gamma, beta)
    out2 = jax.block_until_ready(out2)
    ref2 = _reference(x_big, w1, b1, w2, b2, gamma, beta)
    assert jnp.allclose(out2, ref2, atol=5e-4, rtol=5e-4), "mismatch vs reference (padded case)"

    print("KERNEL_OK")
</pallas_src>

<mosaic_0001>
module attributes {stable_mosaic.version = 11 : i64} {
  func.func @_ffn_kernel(%arg0: i32, %arg1: i32, %arg2: memref<128x128xf32, #tpu.memory_space<vmem>>, %arg3: memref<128x256xf32, #tpu.memory_space<vmem>>, %arg4: memref<1x256xf32, #tpu.memory_space<vmem>>, %arg5: memref<256x128xf32, #tpu.memory_space<vmem>>, %arg6: memref<1x128xf32, #tpu.memory_space<vmem>>, %arg7: memref<1x128xf32, #tpu.memory_space<vmem>>, %arg8: memref<1x128xf32, #tpu.memory_space<vmem>>, %arg9: memref<128x128xf32, #tpu.memory_space<vmem>>, %arg10: memref<128x128xf32, #tpu.memory_space<vmem>>, %arg11: memref<128x128xf32, #tpu.memory_space<vmem>>) attributes {dimension_semantics = [#tpu.dimension_semantics<parallel>, #tpu.dimension_semantics<arbitrary>], iteration_bounds = array<i64: 1, 1>, scalar_prefetch = 0 : i64, scratch_operands = 2 : i64, tpu.core_type = #tpu.core_type<tc>, window_params = [{transform_indices = @transform_0, window_bounds = array<i64: 128, 128>}, {pipeline_mode = #tpu.pipeline_mode<synchronous>, transform_indices = @transform_1, window_bounds = array<i64: 128, 256>}, {pipeline_mode = #tpu.pipeline_mode<synchronous>, transform_indices = @transform_2, window_bounds = array<i64: 1, 256>}, {pipeline_mode = #tpu.pipeline_mode<synchronous>, transform_indices = @transform_3, window_bounds = array<i64: 256, 128>}, {pipeline_mode = #tpu.pipeline_mode<synchronous>, transform_indices = @transform_4, window_bounds = array<i64: 1, 128>}, {pipeline_mode = #tpu.pipeline_mode<synchronous>, transform_indices = @transform_5, window_bounds = array<i64: 1, 128>}, {pipeline_mode = #tpu.pipeline_mode<synchronous>, transform_indices = @transform_6, window_bounds = array<i64: 1, 128>}, {transform_indices = @transform_7, window_bounds = array<i64: 128, 128>}]} {
    %c0_i32 = arith.constant 0 : i32
    %0 = arith.cmpi eq, %arg1, %c0_i32 : i32
    %1 = arith.extui %0 : i1 to i32
    %c0_i32_0 = arith.constant 0 : i32
    %2 = arith.cmpi ne, %1, %c0_i32_0 : i32
    scf.if %2 {
      %c0_18 = arith.constant 0 : index
      %c0_19 = arith.constant 0 : index
      %25 = vector.load %arg2[%c0_18, %c0_19] : memref<128x128xf32, #tpu.memory_space<vmem>>, vector<128x128xf32>
      %cst_20 = arith.constant dense<0.000000e+00> : vector<128xf32>
      %26 = vector.multi_reduction <add>, %25, %cst_20 [1] : vector<128x128xf32> to vector<128xf32>
      %27 = vector.shape_cast %26 : vector<128xf32> to vector<128x1xf32>
      %cst_21 = arith.constant 7.812500e-03 : f32
      %28 = vector.broadcast %cst_21 : f32 to vector<128x1xf32>
      %29 = arith.mulf %27, %28 : vector<128x1xf32>
      %30 = arith.mulf %25, %25 : vector<128x128xf32>
      %cst_22 = arith.constant dense<0.000000e+00> : vector<128xf32>
      %31 = vector.multi_reduction <add>, %30, %cst_22 [1] : vector<128x128xf32> to vector<128xf32>
      %32 = vector.shape_cast %31 : vector<128xf32> to vector<128x1xf32>
      %cst_23 = arith.constant 7.812500e-03 : f32
      %33 = vector.broadcast %cst_23 : f32 to vector<128x1xf32>
      %34 = arith.mulf %32, %33 : vector<128x1xf32>
      %35 = arith.mulf %29, %29 : vector<128x1xf32>
      %36 = arith.subf %34, %35 : vector<128x1xf32>
      %cst_24 = arith.constant 9.99999997E-7 : f32
      %37 = vector.broadcast %cst_24 : f32 to vector<128x1xf32>
      %38 = arith.addf %36, %37 : vector<128x1xf32>
      %39 = math.rsqrt %38 : vector<128x1xf32>
      %c0_25 = arith.constant 0 : index
      %c0_26 = arith.constant 0 : index
      %40 = vector.load %arg7[%c0_25, %c0_26] : memref<1x128xf32, #tpu.memory_space<vmem>>, vector<1x128xf32>
      %c0_27 = arith.constant 0 : index
      %c0_28 = arith.constant 0 : index
      %41 = vector.load %arg8[%c0_27, %c0_28] : memref<1x128xf32, #tpu.memory_space<vmem>>, vector<1x128xf32>
      %42 = vector.broadcast %29 : vector<128x1xf32> to vector<128x128xf32>
      %43 = arith.subf %25, %42 : vector<128x128xf32>
      %44 = vector.broadcast %39 : vector<128x1xf32> to vector<128x128xf32>
      %45 = arith.mulf %43, %44 : vector<128x128xf32>
      %46 = vector.broadcast %40 : vector<1x128xf32> to vector<128x128xf32>
      %47 = arith.mulf %45, %46 : vector<128x128xf32>
      %48 = vector.broadcast %41 : vector<1x128xf32> to vector<128x128xf32>
      %49 = arith.addf %47, %48 : vector<128x128xf32>
      %c0_29 = arith.constant 0 : index
      %c0_30 = arith.constant 0 : index
      %50 = vector.load %arg10[%c0_29, %c0_30] : memref<128x128xf32, #tpu.memory_space<vmem>>, vector<128x128xf32>
      tpu.vector_store %arg10[%c0_29, %c0_30], %49 {strides = array<i32>} : memref<128x128xf32, #tpu.memory_space<vmem>>, vector<128x128xf32>,
      %cst_31 = arith.constant 0.000000e+00 : f32
      %51 = vector.broadcast %cst_31 : f32 to vector<128x128xf32>
      %c0_32 = arith.constant 0 : index
      %c0_33 = arith.constant 0 : index
      %52 = vector.load %arg11[%c0_32, %c0_33] : memref<128x128xf32, #tpu.memory_space<vmem>>, vector<128x128xf32>
      tpu.vector_store %arg11[%c0_32, %c0_33], %51 {strides = array<i32>} : memref<128x128xf32, #tpu.memory_space<vmem>>, vector<128x128xf32>,
    } else {
    }
    %c0 = arith.constant 0 : index
    %c0_1 = arith.constant 0 : index
    %3 = vector.load %arg10[%c0, %c0_1] : memref<128x128xf32, #tpu.memory_space<vmem>>, vector<128x128xf32>
    %c0_2 = arith.constant 0 : index
    %c0_3 = arith.constant 0 : index
    %4 = vector.load %arg3[%c0_2, %c0_3] : memref<128x256xf32, #tpu.memory_space<vmem>>, vector<128x256xf32>
    %cst = arith.constant dense<0.000000e+00> : vector<128x256xf32>
    %5 = tpu.matmul %3, %4, %cst {dimension_numbers = #tpu.dot_dimension_numbers<[1], [0], [0], [1], [0, 0, 1, 1], [], []>} : vector<128x128xf32>, vector<128x256xf32>, vector<128x256xf32> -> vector<128x256xf32>
    %c0_4 = arith.constant 0 : index
    %c0_5 = arith.constant 0 : index
    %6 = vector.load %arg4[%c0_4, %c0_5] : memref<1x256xf32, #tpu.memory_space<vmem>>, vector<1x256xf32>
    %7 = vector.broadcast %6 : vector<1x256xf32> to vector<128x256xf32>
    %8 = arith.addf %5, %7 : vector<128x256xf32>
    %cst_6 = arith.constant 5.000000e-01 : f32
    %9 = vector.broadcast %cst_6 : f32 to vector<128x256xf32>
    %10 = arith.mulf %9, %8 : vector<128x256xf32>
    %cst_7 = arith.constant 0.707106769 : f32
    %11 = vector.broadcast %cst_7 : f32 to vector<128x256xf32>
    %12 = arith.mulf %8, %11 : vector<128x256xf32>
    %13 = math.erf %12 : vector<128x256xf32>
    %cst_8 = arith.constant 1.000000e+00 : f32
    %14 = vector.broadcast %cst_8 : f32 to vector<128x256xf32>
    %15 = arith.addf %14, %13 : vector<128x256xf32>
    %16 = arith.mulf %10, %15 : vector<128x256xf32>
    %c0_9 = arith.constant 0 : index
    %c0_10 = arith.constant 0 : index
    %17 = vector.load %arg11[%c0_9, %c0_10] : memref<128x128xf32, #tpu.memory_space<vmem>>, vector<128x128xf32>
    %c0_11 = arith.constant 0 : index
    %c0_12 = arith.constant 0 : index
    %18 = vector.load %arg5[%c0_11, %c0_12] : memref<256x128xf32, #tpu.memory_space<vmem>>, vector<256x128xf32>
    %cst_13 = arith.constant dense<0.000000e+00> : vector<128x128xf32>
    %19 = tpu.matmul %16, %18, %cst_13 {dimension_numbers = #tpu.dot_dimension_numbers<[1], [0], [0], [1], [0, 0, 1, 1], [], []>} : vector<128x256xf32>, vector<256x128xf32>, vector<128x128xf32> -> vector<128x128xf32>
    %20 = arith.addf %17, %19 : vector<128x128xf32>
    %c0_14 = arith.constant 0 : index
    %c0_15 = arith.constant 0 : index
    %21 = vector.load %arg11[%c0_14, %c0_15] : memref<128x128xf32, #tpu.memory_space<vmem>>, vector<128x128xf32>
    tpu.vector_store %arg11[%c0_14, %c0_15], %20 {strides = array<i32>} : memref<128x128xf32, #tpu.memory_space<vmem>>, vector<128x128xf32>,
    %c0_i32_16 = arith.constant 0 : i32
    %22 = arith.cmpi eq, %arg1, %c0_i32_16 : i32
    %23 = arith.extui %22 : i1 to i32
    %c0_i32_17 = arith.constant 0 : i32
    %24 = arith.cmpi ne, %23, %c0_i32_17 : i32
    scf.if %24 {
      %c0_18 = arith.constant 0 : index
      %c0_19 = arith.constant 0 : index
      %25 = vector.load %arg11[%c0_18, %c0_19] : memref<128x128xf32, #tpu.memory_space<vmem>>, vector<128x128xf32>
      %c0_20 = arith.constant 0 : index
      %c0_21 = arith.constant 0 : index
      %26 = vector.load %arg6[%c0_20, %c0_21] : memref<1x128xf32, #tpu.memory_space<vmem>>, vector<1x128xf32>
      %27 = vector.broadcast %26 : vector<1x128xf32> to vector<128x128xf32>
      %28 = arith.addf %25, %27 : vector<128x128xf32>
      %c0_22 = arith.constant 0 : index
      %c0_23 = arith.constant 0 : index
      %29 = vector.load %arg2[%c0_22, %c0_23] : memref<128x128xf32, #tpu.memory_space<vmem>>, vector<128x128xf32>
      %30 = arith.addf %28, %29 : vector<128x128xf32>
      %c0_24 = arith.constant 0 : index
      %c0_25 = arith.constant 0 : index
      %31 = vector.load %arg9[%c0_24, %c0_25] : memref<128x128xf32, #tpu.memory_space<vmem>>, vector<128x128xf32>
      tpu.vector_store %arg9[%c0_24, %c0_25], %30 {strides = array<i32>} : memref<128x128xf32, #tpu.memory_space<vmem>>, vector<128x128xf32>,
    } else {
    }
    return
  }
  func.func @transform_0(%arg0: i32, %arg1: i32) -> (i32, i32) {
    %c0_i32 = arith.constant 0 : i32
    %c0_i32_0 = arith.constant 0 : i32
    return %arg0, %c0_i32 : i32, i32
  }
  func.func @transform_1(%arg0: i32, %arg1: i32) -> (i32, i32) {
    %c0_i32 = arith.constant 0 : i32
    %c0_i32_0 = arith.constant 0 : i32
    return %c0_i32, %arg1 : i32, i32
  }
  func.func @transform_2(%arg0: i32, %arg1: i32) -> (i32, i32) {
    %c0_i32 = arith.constant 0 : i32
    %c0_i32_0 = arith.constant 0 : i32
    return %c0_i32, %arg1 : i32, i32
  }
  func.func @transform_3(%arg0: i32, %arg1: i32) -> (i32, i32) {
    %c0_i32 = arith.constant 0 : i32
    %c0_i32_0 = arith.constant 0 : i32
    return %arg1, %c0_i32 : i32, i32
  }
  func.func @transform_4(%arg0: i32, %arg1: i32) -> (i32, i32) {
    %c0_i32 = arith.constant 0 : i32
    %c0_i32_0 = arith.constant 0 : i32
    %c0_i32_1 = arith.constant 0 : i32
    return %c0_i32, %c0_i32_0 : i32, i32
  }
  func.func @transform_5(%arg0: i32, %arg1: i32) -> (i32, i32) {
    %c0_i32 = arith.constant 0 : i32
    %c0_i32_0 = arith.constant 0 : i32
    %c0_i32_1 = arith.constant 0 : i32
    return %c0_i32, %c0_i32_0 : i32, i32
  }
  func.func @transform_6(%arg0: i32, %arg1: i32) -> (i32, i32) {
    %c0_i32 = arith.constant 0 : i32
    %c0_i32_0 = arith.constant 0 : i32
    %c0_i32_1 = arith.constant 0 : i32
    return %c0_i32, %c0_i32_0 : i32, i32
  }
  func.func @transform_7(%arg0: i32, %arg1: i32) -> (i32, i32) {
    %c0_i32 = arith.constant 0 : i32
    %c0_i32_0 = arith.constant 0 : i32
    return %arg0, %c0_i32 : i32, i32
  }
}

module attributes {stable_mosaic.version = 11 : i64} {
  func.func @_ffn_kernel(%arg0: i32, %arg1: i32, %arg2: memref<128x128xf32, #tpu.memory_space<vmem>>, %arg3: memref<128x256xf32, #tpu.memory_space<vmem>>, %arg4: memref<1x256xf32, #tpu.memory_space<vmem>>, %arg5: memref<256x128xf32, #tpu.memory_space<vmem>>, %arg6: memref<1x128xf32, #tpu.memory_space<vmem>>, %arg7: memref<1x128xf32, #tpu.memory_space<vmem>>, %arg8: memref<1x128xf32, #tpu.memory_space<vmem>>, %arg9: memref<128x128xf32, #tpu.memory_space<vmem>>, %arg10: memref<128x128xf32, #tpu.memory_space<vmem>>, %arg11: memref<128x128xf32, #tpu.memory_space<vmem>>) attributes {dimension_semantics = [#tpu.dimension_semantics<parallel>, #tpu.dimension_semantics<arbitrary>], iteration_bounds = array<i64: 1, 1>, scalar_prefetch = 0 : i64, scratch_operands = 2 : i64, tpu.core_type = #tpu.core_type<tc>, window_params = [{transform_indices = @transform_0, window_bounds = array<i64: 128, 128>}, {transform_indices = @transform_1, window_bounds = array<i64: 128, 256>}, {transform_indices = @transform_2, window_bounds = array<i64: 1, 256>}, {transform_indices = @transform_3, window_bounds = array<i64: 256, 128>}, {pipeline_mode = #tpu.pipeline_mode<synchronous>, transform_indices = @transform_4, window_bounds = array<i64: 1, 128>}, {pipeline_mode = #tpu.pipeline_mode<synchronous>, transform_indices = @transform_5, window_bounds = array<i64: 1, 128>}, {pipeline_mode = #tpu.pipeline_mode<synchronous>, transform_indices = @transform_6, window_bounds = array<i64: 1, 128>}, {transform_indices = @transform_7, window_bounds = array<i64: 128, 128>}]} {
    %c0_i32 = arith.constant 0 : i32
    %0 = arith.cmpi eq, %arg1, %c0_i32 : i32
    %1 = arith.extui %0 : i1 to i32
    %c0_i32_0 = arith.constant 0 : i32
    %2 = arith.cmpi ne, %1, %c0_i32_0 : i32
    scf.if %2 {
      %c0_18 = arith.constant 0 : index
      %c0_19 = arith.constant 0 : index
      %25 = vector.load %arg2[%c0_18, %c0_19] : memref<128x128xf32, #tpu.memory_space<vmem>>, vector<128x128xf32>
      %cst_20 = arith.constant dense<0.000000e+00> : vector<128xf32>
      %26 = vector.multi_reduction <add>, %25, %cst_20 [1] : vector<128x128xf32> to vector<128xf32>
      %27 = vector.shape_cast %26 : vector<128xf32> to vector<128x1xf32>
      %cst_21 = arith.constant 7.812500e-03 : f32
      %28 = vector.broadcast %cst_21 : f32 to vector<128x1xf32>
      %29 = arith.mulf %27, %28 : vector<128x1xf32>
      %30 = arith.mulf %25, %25 : vector<128x128xf32>
      %cst_22 = arith.constant dense<0.000000e+00> : vector<128xf32>
      %31 = vector.multi_reduction <add>, %30, %cst_22 [1] : vector<128x128xf32> to vector<128xf32>
      %32 = vector.shape_cast %31 : vector<128xf32> to vector<128x1xf32>
      %cst_23 = arith.constant 7.812500e-03 : f32
      %33 = vector.broadcast %cst_23 : f32 to vector<128x1xf32>
      %34 = arith.mulf %32, %33 : vector<128x1xf32>
      %35 = arith.mulf %29, %29 : vector<128x1xf32>
      %36 = arith.subf %34, %35 : vector<128x1xf32>
      %cst_24 = arith.constant 9.99999997E-7 : f32
      %37 = vector.broadcast %cst_24 : f32 to vector<128x1xf32>
      %38 = arith.addf %36, %37 : vector<128x1xf32>
      %39 = math.rsqrt %38 : vector<128x1xf32>
      %c0_25 = arith.constant 0 : index
      %c0_26 = arith.constant 0 : index
      %40 = vector.load %arg7[%c0_25, %c0_26] : memref<1x128xf32, #tpu.memory_space<vmem>>, vector<1x128xf32>
      %c0_27 = arith.constant 0 : index
      %c0_28 = arith.constant 0 : index
      %41 = vector.load %arg8[%c0_27, %c0_28] : memref<1x128xf32, #tpu.memory_space<vmem>>, vector<1x128xf32>
      %42 = vector.broadcast %29 : vector<128x1xf32> to vector<128x128xf32>
      %43 = arith.subf %25, %42 : vector<128x128xf32>
      %44 = vector.broadcast %39 : vector<128x1xf32> to vector<128x128xf32>
      %45 = arith.mulf %43, %44 : vector<128x128xf32>
      %46 = vector.broadcast %40 : vector<1x128xf32> to vector<128x128xf32>
      %47 = arith.mulf %45, %46 : vector<128x128xf32>
      %48 = vector.broadcast %41 : vector<1x128xf32> to vector<128x128xf32>
      %49 = arith.addf %47, %48 : vector<128x128xf32>
      %c0_29 = arith.constant 0 : index
      %c0_30 = arith.constant 0 : index
      %50 = vector.load %arg10[%c0_29, %c0_30] : memref<128x128xf32, #tpu.memory_space<vmem>>, vector<128x128xf32>
      tpu.vector_store %arg10[%c0_29, %c0_30], %49 {strides = array<i32>} : memref<128x128xf32, #tpu.memory_space<vmem>>, vector<128x128xf32>,
      %cst_31 = arith.constant 0.000000e+00 : f32
      %51 = vector.broadcast %cst_31 : f32 to vector<128x128xf32>
      %c0_32 = arith.constant 0 : index
      %c0_33 = arith.constant 0 : index
      %52 = vector.load %arg11[%c0_32, %c0_33] : memref<128x128xf32, #tpu.memory_space<vmem>>, vector<128x128xf32>
      tpu.vector_store %arg11[%c0_32, %c0_33], %51 {strides = array<i32>} : memref<128x128xf32, #tpu.memory_space<vmem>>, vector<128x128xf32>,
    } else {
    }
    %c0 = arith.constant 0 : index
    %c0_1 = arith.constant 0 : index
    %3 = vector.load %arg10[%c0, %c0_1] : memref<128x128xf32, #tpu.memory_space<vmem>>, vector<128x128xf32>
    %c0_2 = arith.constant 0 : index
    %c0_3 = arith.constant 0 : index
    %4 = vector.load %arg3[%c0_2, %c0_3] : memref<128x256xf32, #tpu.memory_space<vmem>>, vector<128x256xf32>
    %cst = arith.constant dense<0.000000e+00> : vector<128x256xf32>
    %5 = tpu.matmul %3, %4, %cst {dimension_numbers = #tpu.dot_dimension_numbers<[1], [0], [0], [1], [0, 0, 1, 1], [], []>} : vector<128x128xf32>, vector<128x256xf32>, vector<128x256xf32> -> vector<128x256xf32>
    %c0_4 = arith.constant 0 : index
    %c0_5 = arith.constant 0 : index
    %6 = vector.load %arg4[%c0_4, %c0_5] : memref<1x256xf32, #tpu.memory_space<vmem>>, vector<1x256xf32>
    %7 = vector.broadcast %6 : vector<1x256xf32> to vector<128x256xf32>
    %8 = arith.addf %5, %7 : vector<128x256xf32>
    %cst_6 = arith.constant 5.000000e-01 : f32
    %9 = vector.broadcast %cst_6 : f32 to vector<128x256xf32>
    %10 = arith.mulf %9, %8 : vector<128x256xf32>
    %cst_7 = arith.constant 0.707106769 : f32
    %11 = vector.broadcast %cst_7 : f32 to vector<128x256xf32>
    %12 = arith.mulf %8, %11 : vector<128x256xf32>
    %13 = math.erf %12 : vector<128x256xf32>
    %cst_8 = arith.constant 1.000000e+00 : f32
    %14 = vector.broadcast %cst_8 : f32 to vector<128x256xf32>
    %15 = arith.addf %14, %13 : vector<128x256xf32>
    %16 = arith.mulf %10, %15 : vector<128x256xf32>
    %c0_9 = arith.constant 0 : index
    %c0_10 = arith.constant 0 : index
    %17 = vector.load %arg11[%c0_9, %c0_10] : memref<128x128xf32, #tpu.memory_space<vmem>>, vector<128x128xf32>
    %c0_11 = arith.constant 0 : index
    %c0_12 = arith.constant 0 : index
    %18 = vector.load %arg5[%c0_11, %c0_12] : memref<256x128xf32, #tpu.memory_space<vmem>>, vector<256x128xf32>
    %cst_13 = arith.constant dense<0.000000e+00> : vector<128x128xf32>
    %19 = tpu.matmul %16, %18, %cst_13 {dimension_numbers = #tpu.dot_dimension_numbers<[1], [0], [0], [1], [0, 0, 1, 1], [], []>} : vector<128x256xf32>, vector<256x128xf32>, vector<128x128xf32> -> vector<128x128xf32>
    %20 = arith.addf %17, %19 : vector<128x128xf32>
    %c0_14 = arith.constant 0 : index
    %c0_15 = arith.constant 0 : index
    %21 = vector.load %arg11[%c0_14, %c0_15] : memref<128x128xf32, #tpu.memory_space<vmem>>, vector<128x128xf32>
    tpu.vector_store %arg11[%c0_14, %c0_15], %20 {strides = array<i32>} : memref<128x128xf32, #tpu.memory_space<vmem>>, vector<128x128xf32>,
    %c0_i32_16 = arith.constant 0 : i32
    %22 = arith.cmpi eq, %arg1, %c0_i32_16 : i32
    %23 = arith.extui %22 : i1 to i32
    %c0_i32_17 = arith.constant 0 : i32
    %24 = arith.cmpi ne, %23, %c0_i32_17 : i32
    scf.if %24 {
      %c0_18 = arith.constant 0 : index
      %c0_19 = arith.constant 0 : index
      %25 = vector.load %arg11[%c0_18, %c0_19] : memref<128x128xf32, #tpu.memory_space<vmem>>, vector<128x128xf32>
      %c0_20 = arith.constant 0 : index
      %c0_21 = arith.constant 0 : index
      %26 = vector.load %arg6[%c0_20, %c0_21] : memref<1x128xf32, #tpu.memory_space<vmem>>, vector<1x128xf32>
      %27 = vector.broadcast %26 : vector<1x128xf32> to vector<128x128xf32>
      %28 = arith.addf %25, %27 : vector<128x128xf32>
      %c0_22 = arith.constant 0 : index
      %c0_23 = arith.constant 0 : index
      %29 = vector.load %arg2[%c0_22, %c0_23] : memref<128x128xf32, #tpu.memory_space<vmem>>, vector<128x128xf32>
      %30 = arith.addf %28, %29 : vector<128x128xf32>
      %c0_24 = arith.constant 0 : index
      %c0_25 = arith.constant 0 : index
      %31 = vector.load %arg9[%c0_24, %c0_25] : memref<128x128xf32, #tpu.memory_space<vmem>>, vector<128x128xf32>
      tpu.vector_store %arg9[%c0_24, %c0_25], %30 {strides = array<i32>} : memref<128x128xf32, #tpu.memory_space<vmem>>, vector<128x128xf32>,
    } else {
    }
    return
  }
  func.func @transform_0(%arg0: i32, %arg1: i32) -> (i32, i32) {
    %c0_i32 = arith.constant 0 : i32
    %c0_i32_0 = arith.constant 0 : i32
    return %arg0, %c0_i32 : i32, i32
  }
  func.func @transform_1(%arg0: i32, %arg1: i32) -> (i32, i32) {
    %c0_i32 = arith.constant 0 : i32
    %c0_i32_0 = arith.constant 0 : i32
    return %c0_i32, %arg1 : i32, i32
  }
  func.func @transform_2(%arg0: i32, %arg1: i32) -> (i32, i32) {
    %c0_i32 = arith.constant 0 : i32
    %c0_i32_0 = arith.constant 0 : i32
    return %c0_i32, %arg1 : i32, i32
  }
  func.func @transform_3(%arg0: i32, %arg1: i32) -> (i32, i32) {
    %c0_i32 = arith.constant 0 : i32
    %c0_i32_0 = arith.constant 0 : i32
    return %arg1, %c0_i32 : i32, i32
  }
  func.func @transform_4(%arg0: i32, %arg1: i32) -> (i32, i32) {
    %c0_i32 = arith.constant 0 : i32
    %c0_i32_0 = arith.constant 0 : i32
    %c0_i32_1 = arith.constant 0 : i32
    return %c0_i32, %c0_i32_0 : i32, i32
  }
  func.func @transform_5(%arg0: i32, %arg1: i32) -> (i32, i32) {
    %c0_i32 = arith.constant 0 : i32
    %c0_i32_0 = arith.constant 0 : i32
    %c0_i32_1 = arith.constant 0 : i32
    return %c0_i32, %c0_i32_0 : i32, i32
  }
  func.func @transform_6(%arg0: i32, %arg1: i32) -> (i32, i32) {
    %c0_i32 = arith.constant 0 : i32
    %c0_i32_0 = arith.constant 0 : i32
    %c0_i32_1 = arith.constant 0 : i32
    return %c0_i32, %c0_i32_0 : i32, i32
  }
  func.func @transform_7(%arg0: i32, %arg1: i32) -> (i32, i32) {
    %c0_i32 = arith.constant 0 : i32
    %c0_i32_0 = arith.constant 0 : i32
    return %arg0, %c0_i32 : i32, i32
  }
}

</mosaic_0001>

<llo_original>
// kernel: tpu_custom_call.1
$region0: #{tpu_custom_call.1}
  #allocation0 [shape = 'u32[]', space=smem, size = 0x4, offset = 0x4, fixed_abs, tag = 'smem constant byte address 0x4 - core index']
  #allocation1 [shape = 'u32[144,128]{1,0:T(1,128)}', space=vmem, size = 0x12000, scoped, tag = 'internal scratch']
  #allocation2 [shape = 'f32[128,128]{1,0:T(8,128)}', space=vmem, size = 0x10000, scoped, tag = 'scratch operand']
  #allocation3 [shape = 'f32[128,128]{1,0:T(8,128)}', space=vmem, size = 0x10000, scoped, tag = 'scratch operand']
  %s0 = inlined_call_operand.hbm [shape: f32[128,128], index: 0, kind: input, shape index: {}]
  %s1 = inlined_call_operand.hbm [shape: f32[128,256], index: 1, kind: input, shape index: {}]
  %s2 = inlined_call_operand.vmem [shape: f32[1,256], index: 2, kind: input, shape index: {}]
  %s3 = inlined_call_operand.hbm [shape: f32[256,128], index: 3, kind: input, shape index: {}]
  %s4 = inlined_call_operand.vmem [shape: f32[1,128], index: 4, kind: input, shape index: {}]
  %s5 = inlined_call_operand.vmem [shape: f32[1,128], index: 5, kind: input, shape index: {}]
  %s6 = inlined_call_operand.vmem [shape: f32[1,128], index: 6, kind: input, shape index: {}]
  %s7 = inlined_call_operand.hbm [shape: f32[128,128], index: 7, kind: output, shape index: {}]
  %s8 = sld [smem:[#allocation0]]
  $region58: #{tpu_custom_call.1} parent=0
    _
  %s10 = ssub.s32 1, %s8
  %s11 = scalar_select 0, %s10, %s8
  $region1: #{tpu_custom_call.1} parent=0
    #allocation4 [shape = 'u8[65536]{0}', space=vmem, size = 0x10000, scoped, tag = 'input window, operand 0, single buffered']
    #allocation5 [shape = 's32[1]{0}', space=sflag, size = 0x4, scoped, tag = 'scoped memory for tpu_custom_call.1']
    #allocation6 [shape = 's32[1]{0}', space=sflag, size = 0x4, scoped, tag = 'scoped memory for tpu_custom_call.1']
    #allocation7 [shape = 'u8[131072]{0}', space=vmem, size = 0x20000, scoped, tag = 'input window, operand 1, single buffered']
    #allocation8 [shape = 's32[1]{0}', space=sflag, size = 0x4, scoped, tag = 'scoped memory for tpu_custom_call.1']
    #allocation9 [shape = 'u8[131072]{0}', space=vmem, size = 0x20000, scoped, tag = 'input window, operand 3, single buffered']
    #allocation10 [shape = 'u8[65536]{0}', space=vmem, size = 0x10000, scoped, tag = 'output window, operand 0, single buffered']
    %12 = vsyncpa [#allocation5], 0
    %13 = vsyncpa [#allocation8], 0
    %14 = vsyncpa [#allocation6], 0
    // Predicated region
    $region2: #{tpu_custom_call.1} parent=1 // pred_check
      _
    $region3: #{tpu_custom_call.1} parent=1 // pred_check_branch
      %16 = sbr.rel (0) target = $region5
    $region4: #{tpu_custom_call.1} parent=1 // pred_region
      %s18 = ssub.s32 2048, 2048
      %19 = vsyncadd [#allocation5], %s18
      %s20 = sshll.u32 [#allocation4], 4
      %s21 = int_to_ptr.vmem [resolvable:$true] %s20
      %26 = dma.hbm_to_vmem [thread:$0]  %s0, 2048, %s21, [#allocation5], 128, 128, 8
    $region5: #{tpu_custom_call.1} parent=1 // pred_fallthru
      _
    // Predicated region
    $region6: #{tpu_custom_call.1} parent=1 // pred_check
      _
    $region7: #{tpu_custom_call.1} parent=1 // pred_check_branch
      %28 = sbr.rel (0) target = $region9
    $region8: #{tpu_custom_call.1} parent=1 // pred_region
      %s30 = ssub.s32 4096, 4096
      %31 = vsyncadd [#allocation8], %s30
      %s32 = sshll.u32 [#allocation7], 4
      %s33 = int_to_ptr.vmem [resolvable:$true] %s32
      %38 = dma.hbm_to_vmem [thread:$0]  %s1, 4096, %s33, [#allocation8], 256, 256, 16
    $region9: #{tpu_custom_call.1} parent=1 // pred_fallthru
      _
    // Predicated region
    $region10: #{tpu_custom_call.1} parent=1 // pred_check
      _
    $region11: #{tpu_custom_call.1} parent=1 // pred_check_branch
      %40 = sbr.rel (0) target = $region13
    $region12: #{tpu_custom_call.1} parent=1 // pred_region
      _
    $region13: #{tpu_custom_call.1} parent=1 // pred_fallthru
      _
    // Predicated region
    $region14: #{tpu_custom_call.1} parent=1 // pred_check
      _
    $region15: #{tpu_custom_call.1} parent=1 // pred_check_branch
      %42 = sbr.rel (0) target = $region17
    $region16: #{tpu_custom_call.1} parent=1 // pred_region
      %s44 = ssub.s32 4096, 4096
      %45 = vsyncadd [#allocation8], %s44
      %s46 = sshll.u32 [#allocation9], 4
      %s47 = int_to_ptr.vmem [resolvable:$true] %s46
      %52 = dma.hbm_to_vmem [thread:$0]  %s3, 4096, %s47, [#allocation8], 128, 128, 8
    $region17: #{tpu_custom_call.1} parent=1 // pred_fallthru
      _
    // Predicated region
    $region18: #{tpu_custom_call.1} parent=1 // pred_check
      _
    $region19: #{tpu_custom_call.1} parent=1 // pred_check_branch
      %54 = sbr.rel (0) target = $region21
    $region20: #{tpu_custom_call.1} parent=1 // pred_region
      _
    $region21: #{tpu_custom_call.1} parent=1 // pred_fallthru
      _
    // Predicated region
    $region22: #{tpu_custom_call.1} parent=1 // pred_check
      _
    $region23: #{tpu_custom_call.1} parent=1 // pred_check_branch
      %56 = sbr.rel (0) target = $region25
    $region24: #{tpu_custom_call.1} parent=1 // pred_region
      _
    $region25: #{tpu_custom_call.1} parent=1 // pred_fallthru
      _
    // Predicated region
    $region26: #{tpu_custom_call.1} parent=1 // pred_check
      _
    $region27: #{tpu_custom_call.1} parent=1 // pred_check_branch
      %58 = sbr.rel (0) target = $region29
    $region28: #{tpu_custom_call.1} parent=1 // pred_region
      _
    $region29: #{tpu_custom_call.1} parent=1 // pred_fallthru
      _
    // Predicated region
    $region30: #{tpu_custom_call.1} parent=1 // pred_check
      _
    $region31: #{tpu_custom_call.1} parent=1 // pred_check_branch
      %60 = sbr.rel (0) target = $region33
    $region32: #{tpu_custom_call.1} parent=1 // pred_region
      %61 = dma.done [#allocation5], 2048
    $region33: #{tpu_custom_call.1} parent=1 // pred_fallthru
      _
    // Predicated region
    $region34: #{tpu_custom_call.1} parent=1 // pred_check
      _
    $region35: #{tpu_custom_call.1} parent=1 // pred_check_branch
      %63 = sbr.rel (0) target = $region37
    $region36: #{tpu_custom_call.1} parent=1 // pred_region
      %64 = dma.done [#allocation8], 4096
    $region37: #{tpu_custom_call.1} parent=1 // pred_fallthru
      _
    // Predicated region
    $region38: #{tpu_custom_call.1} parent=1 // pred_check
      _
    $region39: #{tpu_custom_call.1} parent=1 // pred_check_branch
      %66 = sbr.rel (0) target = $region41
    $region40: #{tpu_custom_call.1} parent=1 // pred_region
      %67 = dma.done [#allocation8], 4096
    $region41: #{tpu_custom_call.1} parent=1 // pred_fallthru
      _
    %p68 = scmp.eq.s32.totalorder 0, 0
    // Predicated region
    $region42: #{tpu_custom_call.1} parent=1 // pred_check
      %p69 = pneg %p68
    $region43: #{tpu_custom_call.1} parent=1 // pred_check_branch
      %71 = sbr.rel (%p69) target = $region45
    $region44: #{tpu_custom_call.1} parent=1 // pred_region
      %v72 = vld [vmem:[#allocation4] sm:$0xff]
      %v73 = vld [vmem:[#allocation4 + $0x8] sm:$0xff]
      %v74 = vld [vmem:[#allocation4 + $0x10] sm:$0xff]
      %v75 = vld [vmem:[#allocation4 + $0x18] sm:$0xff]
      %v76 = vld [vmem:[#allocation4 + $0x20] sm:$0xff]
      %v77 = vld [vmem:[#allocation4 + $0x28] sm:$0xff]
      %v78 = vld [vmem:[#allocation4 + $0x30] sm:$0xff]
      %v79 = vld [vmem:[#allocation4 + $0x38] sm:$0xff]
      %v80 = vld [vmem:[#allocation4 + $0x40] sm:$0xff]
      %v81 = vld [vmem:[#allocation4 + $0x48] sm:$0xff]
      %v82 = vld [vmem:[#allocation4 + $0x50] sm:$0xff]
      %v83 = vld [vmem:[#allocation4 + $0x58] sm:$0xff]
      %v84 = vld [vmem:[#allocation4 + $0x60] sm:$0xff]
      %v85 = vld [vmem:[#allocation4 + $0x68] sm:$0xff]
      %v86 = vld [vmem:[#allocation4 + $0x70] sm:$0xff]
      %v87 = vld [vmem:[#allocation4 + $0x78] sm:$0xff]
      %88 = vadd.xlane.f32.xlu0 %v72
      %v89 = vpop.xlane.xlu0 %88
      %90 = vadd.xlane.f32.xlu0 %v73
      %v91 = vpop.xlane.xlu0 %90
      %92 = vadd.xlane.f32.xlu0 %v74
      %v93 = vpop.xlane.xlu0 %92
      %94 = vadd.xlane.f32.xlu0 %v75
      %v95 = vpop.xlane.xlu0 %94
      %96 = vadd.xlane.f32.xlu0 %v76
      %v97 = vpop.xlane.xlu0 %96
      %98 = vadd.xlane.f32.xlu0 %v77
      %v99 = vpop.xlane.xlu0 %98
      %100 = vadd.xlane.f32.xlu0 %v78
      %v101 = vpop.xlane.xlu0 %100
      %102 = vadd.xlane.f32.xlu0 %v79
      %v103 = vpop.xlane.xlu0 %102
      %104 = vadd.xlane.f32.xlu0 %v80
      %v105 = vpop.xlane.xlu0 %104
      %106 = vadd.xlane.f32.xlu0 %v81
      %v107 = vpop.xlane.xlu0 %106
      %108 = vadd.xlane.f32.xlu0 %v82
      %v109 = vpop.xlane.xlu0 %108
      %110 = vadd.xlane.f32.xlu0 %v83
      %v111 = vpop.xlane.xlu0 %110
      %112 = vadd.xlane.f32.xlu0 %v84
      %v113 = vpop.xlane.xlu0 %112
      %114 = vadd.xlane.f32.xlu0 %v85
      %v115 = vpop.xlane.xlu0 %114
      %116 = vadd.xlane.f32.xlu0 %v86
      %v117 = vpop.xlane.xlu0 %116
      %118 = vadd.xlane.f32.xlu0 %v87
      %v119 = vpop.xlane.xlu0 %118
      %v120 = vmul.f32 %v89, 0.0078125
      %v121 = vmul.f32 %v91, 0.0078125
      %v122 = vmul.f32 %v93, 0.0078125
      %v123 = vmul.f32 %v95, 0.0078125
      %v124 = vmul.f32 %v97, 0.0078125
      %v125 = vmul.f32 %v99, 0.0078125
      %v126 = vmul.f32 %v101, 0.0078125
      %v127 = vmul.f32 %v103, 0.0078125
      %v128 = vmul.f32 %v105, 0.0078125
      %v129 = vmul.f32 %v107, 0.0078125
      %v130 = vmul.f32 %v109, 0.0078125
      %v131 = vmul.f32 %v111, 0.0078125
      %v132 = vmul.f32 %v113, 0.0078125
      %v133 = vmul.f32 %v115, 0.0078125
      %v134 = vmul.f32 %v117, 0.0078125
      %v135 = vmul.f32 %v119, 0.0078125
      %v136 = vmul.f32 %v72, %v72
      %v137 = vmul.f32 %v73, %v73
      %v138 = vmul.f32 %v74, %v74
      %v139 = vmul.f32 %v75, %v75
      %v140 = vmul.f32 %v76, %v76
      %v141 = vmul.f32 %v77, %v77
      %v142 = vmul.f32 %v78, %v78
      %v143 = vmul.f32 %v79, %v79
      %v144 = vmul.f32 %v80, %v80
      %v145 = vmul.f32 %v81, %v81
      %v146 = vmul.f32 %v82, %v82
      %v147 = vmul.f32 %v83, %v83
      %v148 = vmul.f32 %v84, %v84
      %v149 = vmul.f32 %v85, %v85
      %v150 = vmul.f32 %v86, %v86
      %v151 = vmul.f32 %v87, %v87
      %152 = vadd.xlane.f32.xlu0 %v136
      %v153 = vpop.xlane.xlu0 %152
      %154 = vadd.xlane.f32.xlu0 %v137
      %v155 = vpop.xlane.xlu0 %154
      %156 = vadd.xlane.f32.xlu0 %v138
      %v157 = vpop.xlane.xlu0 %156
      %158 = vadd.xlane.f32.xlu0 %v139
      %v159 = vpop.xlane.xlu0 %158
      %160 = vadd.xlane.f32.xlu0 %v140
      %v161 = vpop.xlane.xlu0 %160
      %162 = vadd.xlane.f32.xlu0 %v141
      %v163 = vpop.xlane.xlu0 %162
      %164 = vadd.xlane.f32.xlu0 %v142
      %v165 = vpop.xlane.xlu0 %164
      %166 = vadd.xlane.f32.xlu0 %v143
      %v167 = vpop.xlane.xlu0 %166
      %168 = vadd.xlane.f32.xlu0 %v144
      %v169 = vpop.xlane.xlu0 %168
      %170 = vadd.xlane.f32.xlu0 %v145
      %v171 = vpop.xlane.xlu0 %170
      %172 = vadd.xlane.f32.xlu0 %v146
      %v173 = vpop.xlane.xlu0 %172
      %174 = vadd.xlane.f32.xlu0 %v147
      %v175 = vpop.xlane.xlu0 %174
      %176 = vadd.xlane.f32.xlu0 %v148
      %v177 = vpop.xlane.xlu0 %176
      %178 = vadd.xlane.f32.xlu0 %v149
      %v179 = vpop.xlane.xlu0 %178
      %180 = vadd.xlane.f32.xlu0 %v150
      %v181 = vpop.xlane.xlu0 %180
      %182 = vadd.xlane.f32.xlu0 %v151
      %v183 = vpop.xlane.xlu0 %182
      %v184 = vmul.f32 %v153, 0.0078125
      %v185 = vmul.f32 %v155, 0.0078125
      %v186 = vmul.f32 %v157, 0.0078125
      %v187 = vmul.f32 %v159, 0.0078125
      %v188 = vmul.f32 %v161, 0.0078125
      %v189 = vmul.f32 %v163, 0.0078125
      %v190 = vmul.f32 %v165, 0.0078125
      %v191 = vmul.f32 %v167, 0.0078125
      %v192 = vmul.f32 %v169, 0.0078125
      %v193 = vmul.f32 %v171, 0.0078125
      %v194 = vmul.f32 %v173, 0.0078125
      %v195 = vmul.f32 %v175, 0.0078125
      %v196 = vmul.f32 %v177, 0.0078125
      %v197 = vmul.f32 %v179, 0.0078125
      %v198 = vmul.f32 %v181, 0.0078125
      %v199 = vmul.f32 %v183, 0.0078125
      %v200 = vmul.f32 %v120, %v120
      %v201 = vmul.f32 %v121, %v121
      %v202 = vmul.f32 %v122, %v122
      %v203 = vmul.f32 %v123, %v123
      %v204 = vmul.f32 %v124, %v124
      %v205 = vmul.f32 %v125, %v125
      %v206 = vmul.f32 %v126, %v126
      %v207 = vmul.f32 %v127, %v127
      %v208 = vmul.f32 %v128, %v128
      %v209 = vmul.f32 %v129, %v129
      %v210 = vmul.f32 %v130, %v130
      %v211 = vmul.f32 %v131, %v131
      %v212 = vmul.f32 %v132, %v132
      %v213 = vmul.f32 %v133, %v133
      %v214 = vmul.f32 %v134, %v134
      %v215 = vmul.f32 %v135, %v135
      %v216 = vsub.f32 %v184, %v200
      %v217 = vsub.f32 %v185, %v201
      %v218 = vsub.f32 %v186, %v202
      %v219 = vsub.f32 %v187, %v203
      %v220 = vsub.f32 %v188, %v204
      %v221 = vsub.f32 %v189, %v205
      %v222 = vsub.f32 %v190, %v206
      %v223 = vsub.f32 %v191, %v207
      %v224 = vsub.f32 %v192, %v208
      %v225 = vsub.f32 %v193, %v209
      %v226 = vsub.f32 %v194, %v210
      %v227 = vsub.f32 %v195, %v211
      %v228 = vsub.f32 %v196, %v212
      %v229 = vsub.f32 %v197, %v213
      %v230 = vsub.f32 %v198, %v214
      %v231 = vsub.f32 %v199, %v215
      %v232 = vadd.f32 %v216, 1e-06
      %v233 = vadd.f32 %v217, 1e-06
      %v234 = vadd.f32 %v218, 1e-06
      %v235 = vadd.f32 %v219, 1e-06
      %v236 = vadd.f32 %v220, 1e-06
      %v237 = vadd.f32 %v221, 1e-06
      %v238 = vadd.f32 %v222, 1e-06
      %v239 = vadd.f32 %v223, 1e-06
      %v240 = vadd.f32 %v224, 1e-06
      %v241 = vadd.f32 %v225, 1e-06
      %v242 = vadd.f32 %v226, 1e-06
      %v243 = vadd.f32 %v227, 1e-06
      %v244 = vadd.f32 %v228, 1e-06
      %v245 = vadd.f32 %v229, 1e-06
      %v246 = vadd.f32 %v230, 1e-06
      %v247 = vadd.f32 %v231, 1e-06
      %v248 = vrsqrt.pop %v232
      %v249 = vrsqrt.pop %v233
      %v250 = vrsqrt.pop %v234
      %v251 = vrsqrt.pop %v235
      %v252 = vrsqrt.pop %v236
      %v253 = vrsqrt.pop %v237
      %v254 = vrsqrt.pop %v238
      %v255 = vrsqrt.pop %v239
      %v256 = vrsqrt.pop %v240
      %v257 = vrsqrt.pop %v241
      %v258 = vrsqrt.pop %v242
      %v259 = vrsqrt.pop %v243
      %v260 = vrsqrt.pop %v244
      %v261 = vrsqrt.pop %v245
      %v262 = vrsqrt.pop %v246
      %v263 = vrsqrt.pop %v247
      %v264 = vld [vmem:[%s5] sm:$0x1]
      %v265 = vld [vmem:[%s6] sm:$0x1]
      %v266 = vsub.f32 %v72, %v120
      %v267 = vsub.f32 %v73, %v121
      %v268 = vsub.f32 %v74, %v122
      %v269 = vsub.f32 %v75, %v123
      %v270 = vsub.f32 %v76, %v124
      %v271 = vsub.f32 %v77, %v125
      %v272 = vsub.f32 %v78, %v126
      %v273 = vsub.f32 %v79, %v127
      %v274 = vsub.f32 %v80, %v128
      %v275 = vsub.f32 %v81, %v129
      %v276 = vsub.f32 %v82, %v130
      %v277 = vsub.f32 %v83, %v131
      %v278 = vsub.f32 %v84, %v132
      %v279 = vsub.f32 %v85, %v133
      %v280 = vsub.f32 %v86, %v134
      %v281 = vsub.f32 %v87, %v135
      %v282 = vmul.f32 %v266, %v248
      %v283 = vmul.f32 %v267, %v249
      %v284 = vmul.f32 %v268, %v250
      %v285 = vmul.f32 %v269, %v251
      %v286 = vmul.f32 %v270, %v252
      %v287 = vmul.f32 %v271, %v253
      %v288 = vmul.f32 %v272, %v254
      %v289 = vmul.f32 %v273, %v255
      %v290 = vmul.f32 %v274, %v256
      %v291 = vmul.f32 %v275, %v257
      %v292 = vmul.f32 %v276, %v258
      %v293 = vmul.f32 %v277, %v259
      %v294 = vmul.f32 %v278, %v260
      %v295 = vmul.f32 %v279, %v261
      %v296 = vmul.f32 %v280, %v262
      %v297 = vmul.f32 %v281, %v263
      %v299 = vlaneseq
      %v300 = vshrl.u32 %v299, 7
      %v301 = vsub.s32 0, %v300
      %v302 = vrot.slane %v264, %v301
      %v304 = vmul.f32 %v282, %v302
      %v305 = vmul.f32 %v283, %v302
      %v306 = vmul.f32 %v284, %v302
      %v307 = vmul.f32 %v285, %v302
      %v308 = vmul.f32 %v286, %v302
      %v309 = vmul.f32 %v287, %v302
      %v310 = vmul.f32 %v288, %v302
      %v311 = vmul.f32 %v289, %v302
      %v312 = vmul.f32 %v290, %v302
      %v313 = vmul.f32 %v291, %v302
      %v314 = vmul.f32 %v292, %v302
      %v315 = vmul.f32 %v293, %v302
      %v316 = vmul.f32 %v294, %v302
      %v317 = vmul.f32 %v295, %v302
      %v318 = vmul.f32 %v296, %v302
      %v319 = vmul.f32 %v297, %v302
      %v321 = vlaneseq
      %v322 = vshrl.u32 %v321, 7
      %v323 = vsub.s32 0, %v322
      %v324 = vrot.slane %v265, %v323
      %v326 = vadd.f32 %v304, %v324
      %v327 = vadd.f32 %v305, %v324
      %v328 = vadd.f32 %v306, %v324
      %v329 = vadd.f32 %v307, %v324
      %v330 = vadd.f32 %v308, %v324
      %v331 = vadd.f32 %v309, %v324
      %v332 = vadd.f32 %v310, %v324
      %v333 = vadd.f32 %v311, %v324
      %v334 = vadd.f32 %v312, %v324
      %v335 = vadd.f32 %v313, %v324
      %v336 = vadd.f32 %v314, %v324
      %v337 = vadd.f32 %v315, %v324
      %v338 = vadd.f32 %v316, %v324
      %v339 = vadd.f32 %v317, %v324
      %v340 = vadd.f32 %v318, %v324
      %v341 = vadd.f32 %v319, %v324
      %342 = vst [vmem:[#allocation2] sm:$0xff] %v326
      %343 = vst [vmem:[#allocation2 + $0x8] sm:$0xff] %v327
      %344 = vst [vmem:[#allocation2 + $0x10] sm:$0xff] %v328
      %345 = vst [vmem:[#allocation2 + $0x18] sm:$0xff] %v329
      %346 = vst [vmem:[#allocation2 + $0x20] sm:$0xff] %v330
      %347 = vst [vmem:[#allocation2 + $0x28] sm:$0xff] %v331
      %348 = vst [vmem:[#allocation2 + $0x30] sm:$0xff] %v332
      %349 = vst [vmem:[#allocation2 + $0x38] sm:$0xff] %v333
      %350 = vst [vmem:[#allocation2 + $0x40] sm:$0xff] %v334
      %351 = vst [vmem:[#allocation2 + $0x48] sm:$0xff] %v335
      %352 = vst [vmem:[#allocation2 + $0x50] sm:$0xff] %v336
      %353 = vst [vmem:[#allocation2 + $0x58] sm:$0xff] %v337
      %354 = vst [vmem:[#allocation2 + $0x60] sm:$0xff] %v338
      %355 = vst [vmem:[#allocation2 + $0x68] sm:$0xff] %v339
      %356 = vst [vmem:[#allocation2 + $0x70] sm:$0xff] %v340
      %357 = vst [vmem:[#allocation2 + $0x78] sm:$0xff] %v341
      %358 = vst [vmem:[#allocation3] sm:$0xff] 0.0
      %359 = vst [vmem:[#allocation3 + $0x8] sm:$0xff] 0.0
      %360 = vst [vmem:[#allocation3 + $0x10] sm:$0xff] 0.0
      %361 = vst [vmem:[#allocation3 + $0x18] sm:$0xff] 0.0
      %362 = vst [vmem:[#allocation3 + $0x20] sm:$0xff] 0.0
      %363 = vst [vmem:[#allocation3 + $0x28] sm:$0xff] 0.0
      %364 = vst [vmem:[#allocation3 + $0x30] sm:$0xff] 0.0
      %365 = vst [vmem:[#allocation3 + $0x38] sm:$0xff] 0.0
      %366 = vst [vmem:[#allocation3 + $0x40] sm:$0xff] 0.0
      %367 = vst [vmem:[#allocation3 + $0x48] sm:$0xff] 0.0
      %368 = vst [vmem:[#allocation3 + $0x50] sm:$0xff] 0.0
      %369 = vst [vmem:[#allocation3 + $0x58] sm:$0xff] 0.0
      %370 = vst [vmem:[#allocation3 + $0x60] sm:$0xff] 0.0
      %371 = vst [vmem:[#allocation3 + $0x68] sm:$0xff] 0.0
      %372 = vst [vmem:[#allocation3 + $0x70] sm:$0xff] 0.0
      %373 = vst [vmem:[#allocation3 + $0x78] sm:$0xff] 0.0
    $region45: #{tpu_custom_call.1} parent=1 // pred_fallthru
      _
    %v374 = vld [vmem:[#allocation2] sm:$0xff]
    %v375 = vld [vmem:[#allocation2 + $0x8] sm:$0xff]
    %v376 = vld [vmem:[#allocation2 + $0x10] sm:$0xff]
    %v377 = vld [vmem:[#allocation2 + $0x18] sm:$0xff]
    %v378 = vld [vmem:[#allocation2 + $0x20] sm:$0xff]
    %v379 = vld [vmem:[#allocation2 + $0x28] sm:$0xff]
    %v380 = vld [vmem:[#allocation2 + $0x30] sm:$0xff]
    %v381 = vld [vmem:[#allocation2 + $0x38] sm:$0xff]
    %v382 = vld [vmem:[#allocation2 + $0x40] sm:$0xff]
    %v383 = vld [vmem:[#allocation2 + $0x48] sm:$0xff]
    %v384 = vld [vmem:[#allocation2 + $0x50] sm:$0xff]
    %v385 = vld [vmem:[#allocation2 + $0x58] sm:$0xff]
    %v386 = vld [vmem:[#allocation2 + $0x60] sm:$0xff]
    %v387 = vld [vmem:[#allocation2 + $0x68] sm:$0xff]
    %v388 = vld [vmem:[#allocation2 + $0x70] sm:$0xff]
    %v389 = vld [vmem:[#allocation2 + $0x78] sm:$0xff]
    %v390 = vld [vmem:[#allocation7] sm:$0xff]
    %v391 = vld [vmem:[#allocation7 + $0x8] sm:$0xff]
    %v392 = vld [vmem:[#allocation7 + $0x10] sm:$0xff]
    %v393 = vld [vmem:[#allocation7 + $0x18] sm:$0xff]
    %v394 = vld [vmem:[#allocation7 + $0x20] sm:$0xff]
    %v395 = vld [vmem:[#allocation7 + $0x28] sm:$0xff]
    %v396 = vld [vmem:[#allocation7 + $0x30] sm:$0xff]
    %v397 = vld [vmem:[#allocation7 + $0x38] sm:$0xff]
    %v398 = vld [vmem:[#allocation7 + $0x40] sm:$0xff]
    %v399 = vld [vmem:[#allocation7 + $0x48] sm:$0xff]
    %v400 = vld [vmem:[#allocation7 + $0x50] sm:$0xff]
    %v401 = vld [vmem:[#allocation7 + $0x58] sm:$0xff]
    %v402 = vld [vmem:[#allocation7 + $0x60] sm:$0xff]
    %v403 = vld [vmem:[#allocation7 + $0x68] sm:$0xff]
    %v404 = vld [vmem:[#allocation7 + $0x70] sm:$0xff]
    %v405 = vld [vmem:[#allocation7 + $0x78] sm:$0xff]
    %v406 = vld [vmem:[#allocation7 + $0x80] sm:$0xff]
    %v407 = vld [vmem:[#allocation7 + $0x88] sm:$0xff]
    %v408 = vld [vmem:[#allocation7 + $0x90] sm:$0xff]
    %v409 = vld [vmem:[#allocation7 + $0x98] sm:$0xff]
    %v410 = vld [vmem:[#allocation7 + $0xa0] sm:$0xff]
    %v411 = vld [vmem:[#allocation7 + $0xa8] sm:$0xff]
    %v412 = vld [vmem:[#allocation7 + $0xb0] sm:$0xff]
    %v413 = vld [vmem:[#allocation7 + $0xb8] sm:$0xff]
    %v414 = vld [vmem:[#allocation7 + $0xc0] sm:$0xff]
    %v415 = vld [vmem:[#allocation7 + $0xc8] sm:$0xff]
    %v416 = vld [vmem:[#allocation7 + $0xd0] sm:$0xff]
    %v417 = vld [vmem:[#allocation7 + $0xd8] sm:$0xff]
    %v418 = vld [vmem:[#allocation7 + $0xe0] sm:$0xff]
    %v419 = vld [vmem:[#allocation7 + $0xe8] sm:$0xff]
    %v420 = vld [vmem:[#allocation7 + $0xf0] sm:$0xff]
    %v421 = vld [vmem:[#allocation7 + $0xf8] sm:$0xff]
    %v422 = vld [vmem:[%s2] sm:$0x3]
    %v424 = vlaneseq
    %v425 = vshrl.u32 %v424, 7
    %v426 = vsub.s32 0, %v425
    %v427 = vrot.slane %v422, %v426
    %v428 = vlaneseq
    %v429 = vshrl.u32 %v428, 7
    %v430 = vsub.s32 1, %v429
    %v431 = vrot.slane %v422, %v430
    %434 = vmatprep.subr.mxu0 %v421
    %435 = vmatpush1.msra.mxu0 %v420
    %436 = vmatprep.subr.mxu0 %v419
    %437 = vmatpush1.msra.mxu0 %v418
    %438 = vmatprep.subr.mxu0 %v417
    %439 = vmatpush1.msra.mxu0 %v416
    %440 = vmatprep.subr.mxu0 %v415
    %441 = vmatpush1.msra.mxu0 %v414
    %442 = vmatprep.subr.mxu0 %v413
    %443 = vmatpush1.msra.mxu0 %v412
    %444 = vmatprep.subr.mxu0 %v411
    %445 = vmatpush1.msra.mxu0 %v410
    %446 = vmatprep.subr.mxu0 %v409
    %447 = vmatpush1.msra.mxu0 %v408
    %448 = vmatprep.subr.mxu0 %v407
    %449 = vmatpush1.msra.mxu0 %v406
    %450 = vmatprep.subr.mxu0 %v405
    %451 = vmatpush1.msra.mxu0 %v404
    %452 = vmatprep.subr.mxu0 %v403
    %453 = vmatpush1.msra.mxu0 %v402
    %454 = vmatprep.subr.mxu0 %v401
    %455 = vmatpush1.msra.mxu0 %v400
    %456 = vmatprep.subr.mxu0 %v399
    %457 = vmatpush1.msra.mxu0 %v398
    %458 = vmatprep.subr.mxu0 %v397
    %459 = vmatpush1.msra.mxu0 %v396
    %460 = vmatprep.subr.mxu0 %v395
    %461 = vmatpush1.msra.mxu0 %v394
    %462 = vmatprep.subr.mxu0 %v393
    %463 = vmatpush1.msra.mxu0 %v392
    %464 = vmatprep.subr.mxu0 %v391
    %465 = vmatpush1.msra.mxu0 %v390
    %466 = vmatprep.subr.mxu0 0.0
    %467 = vmatpush2.msra.mxu0 0.0
    %468 = vmatprep.subr.mxu0 0.0
    %469 = vmatpush2.msra.mxu0 0.0
    %470 = vmatprep.subr.mxu0 0.0
    %471 = vmatpush2.msra.mxu0 0.0
    %472 = vmatprep.subr.mxu0 0.0
    %473 = vmatpush2.msra.mxu0 0.0
    %474 = vmatprep.subr.mxu0 0.0
    %475 = vmatpush2.msra.mxu0 0.0
    %476 = vmatprep.subr.mxu0 0.0
    %477 = vmatpush2.msra.mxu0 0.0
    %478 = vmatprep.subr.mxu0 0.0
    %479 = vmatpush2.msra.mxu0 0.0
    %480 = vmatprep.subr.mxu0 0.0
    %481 = vmatpush2.msra.mxu0 0.0
    %482 = vmatprep.subr.mxu0 0.0
    %483 = vmatpush2.msra.mxu0 0.0
    %484 = vmatprep.subr.mxu0 0.0
    %485 = vmatpush2.msra.mxu0 0.0
    %486 = vmatprep.subr.mxu0 0.0
    %487 = vmatpush2.msra.mxu0 0.0
    %488 = vmatprep.subr.mxu0 0.0
    %489 = vmatpush2.msra.mxu0 0.0
    %490 = vmatprep.subr.mxu0 0.0
    %491 = vmatpush2.msra.mxu0 0.0
    %492 = vmatprep.subr.mxu0 0.0
    %493 = vmatpush2.msra.mxu0 0.0
    %494 = vmatprep.subr.mxu0 0.0
    %495 = vmatpush2.msra.mxu0 0.0
    %496 = vmatprep.subr.mxu0 0.0
    %497 = vmatpush2.msra.mxu0 0.0
    %498 = vmatprep.mubr.f32.mxu0 0.0
    %499 = vmatmul.mubr.f32.gmra.mxu0 %v374
    %v500 = vpop.f32.mrf.mxu0
    %v501 = vadd.f32 %v427, %v500
    %v502 = vpop.f32.mrf.mxu0
    %v503 = vadd.f32 %v431, %v502
    %504 = vmatprep.mubr.f32.mxu0 0.0
    %505 = vmatmul.mubr.f32.gmra.mxu0 %v375
    %v506 = vpop.f32.mrf.mxu0
    %v507 = vadd.f32 %v427, %v506
    %v508 = vpop.f32.mrf.mxu0
    %v509 = vadd.f32 %v431, %v508
    %510 = vmatprep.mubr.f32.mxu0 0.0
    %511 = vmatmul.mubr.f32.gmra.mxu0 %v376
    %v512 = vpop.f32.mrf.mxu0
    %v513 = vadd.f32 %v427, %v512
    %v514 = vpop.f32.mrf.mxu0
    %v515 = vadd.f32 %v431, %v514
    %516 = vmatprep.mubr.f32.mxu0 0.0
    %517 = vmatmul.mubr.f32.gmra.mxu0 %v377
    %v518 = vpop.f32.mrf.mxu0
    %v519 = vadd.f32 %v427, %v518
    %v520 = vpop.f32.mrf.mxu0
    %v521 = vadd.f32 %v431, %v520
    %522 = vmatprep.mubr.f32.mxu0 0.0
    %523 = vmatmul.mubr.f32.gmra.mxu0 %v378
    %v524 = vpop.f32.mrf.mxu0
    %v525 = vadd.f32 %v427, %v524
    %v526 = vpop.f32.mrf.mxu0
    %v527 = vadd.f32 %v431, %v526
    %528 = vmatprep.mubr.f32.mxu0 0.0
    %529 = vmatmul.mubr.f32.gmra.mxu0 %v379
    %v530 = vpop.f32.mrf.mxu0
    %v531 = vadd.f32 %v427, %v530
    %v532 = vpop.f32.mrf.mxu0
    %v533 = vadd.f32 %v431, %v532
    %534 = vmatprep.mubr.f32.mxu0 0.0
    %535 = vmatmul.mubr.f32.gmra.mxu0 %v380
    %v536 = vpop.f32.mrf.mxu0
    %v537 = vadd.f32 %v427, %v536
    %v538 = vpop.f32.mrf.mxu0
    %v539 = vadd.f32 %v431, %v538
    %540 = vmatprep.mubr.f32.mxu0 0.0
    %541 = vmatmul.mubr.f32.gmra.mxu0 %v381
    %v542 = vpop.f32.mrf.mxu0
    %v543 = vadd.f32 %v427, %v542
    %v544 = vpop.f32.mrf.mxu0
    %v545 = vadd.f32 %v431, %v544
    %546 = vmatprep.mubr.f32.mxu0 0.0
    %547 = vmatmul.mubr.f32.gmra.mxu0 %v382
    %v548 = vpop.f32.mrf.mxu0
    %v549 = vadd.f32 %v427, %v548
    %v550 = vpop.f32.mrf.mxu0
    %v551 = vadd.f32 %v431, %v550
    %552 = vmatprep.mubr.f32.mxu0 0.0
    %553 = vmatmul.mubr.f32.gmra.mxu0 %v383
    %v554 = vpop.f32.mrf.mxu0
    %v555 = vadd.f32 %v427, %v554
    %v556 = vpop.f32.mrf.mxu0
    %v557 = vadd.f32 %v431, %v556
    %558 = vmatprep.mubr.f32.mxu0 0.0
    %559 = vmatmul.mubr.f32.gmra.mxu0 %v384
    %v560 = vpop.f32.mrf.mxu0
    %v561 = vadd.f32 %v427, %v560
    %v562 = vpop.f32.mrf.mxu0
    %v563 = vadd.f32 %v431, %v562
    %564 = vmatprep.mubr.f32.mxu0 0.0
    %565 = vmatmul.mubr.f32.gmra.mxu0 %v385
    %v566 = vpop.f32.mrf.mxu0
    %v567 = vadd.f32 %v427, %v566
    %v568 = vpop.f32.mrf.mxu0
    %v569 = vadd.f32 %v431, %v568
    %570 = vmatprep.mubr.f32.mxu0 0.0
    %571 = vmatmul.mubr.f32.gmra.mxu0 %v386
    %v572 = vpop.f32.mrf.mxu0
    %v573 = vadd.f32 %v427, %v572
    %v574 = vpop.f32.mrf.mxu0
    %v575 = vadd.f32 %v431, %v574
    %576 = vmatprep.mubr.f32.mxu0 0.0
    %577 = vmatmul.mubr.f32.gmra.mxu0 %v387
    %v578 = vpop.f32.mrf.mxu0
    %v579 = vadd.f32 %v427, %v578
    %v580 = vpop.f32.mrf.mxu0
    %v581 = vadd.f32 %v431, %v580
    %582 = vmatprep.mubr.f32.mxu0 0.0
    %583 = vmatmul.mubr.f32.gmra.mxu0 %v388
    %v584 = vpop.f32.mrf.mxu0
    %v585 = vadd.f32 %v427, %v584
    %v586 = vpop.f32.mrf.mxu0
    %v587 = vadd.f32 %v431, %v586
    %588 = vmatprep.mubr.f32.mxu0 0.0
    %589 = vmatmul.mubr.f32.gmra.mxu0 %v389
    %v590 = vpop.f32.mrf.mxu0
    %v591 = vadd.f32 %v427, %v590
    %v592 = vpop.f32.mrf.mxu0
    %v593 = vadd.f32 %v431, %v592
    %594 = vdwg.mxu0
    %v595 = vmul.f32 %v501, 0.5
    %v596 = vmul.f32 %v503, 0.5
    %v597 = vmul.f32 %v507, 0.5
    %v598 = vmul.f32 %v509, 0.5
    %v599 = vmul.f32 %v513, 0.5
    %v600 = vmul.f32 %v515, 0.5
    %v601 = vmul.f32 %v519, 0.5
    %v602 = vmul.f32 %v521, 0.5
    %v603 = vmul.f32 %v525, 0.5
    %v604 = vmul.f32 %v527, 0.5
    %v605 = vmul.f32 %v531, 0.5
    %v606 = vmul.f32 %v533, 0.5
    %v607 = vmul.f32 %v537, 0.5
    %v608 = vmul.f32 %v539, 0.5
    %v609 = vmul.f32 %v543, 0.5
    %v610 = vmul.f32 %v545, 0.5
    %v611 = vmul.f32 %v549, 0.5
    %v612 = vmul.f32 %v551, 0.5
    %v613 = vmul.f32 %v555, 0.5
    %v614 = vmul.f32 %v557, 0.5
    %v615 = vmul.f32 %v561, 0.5
    %v616 = vmul.f32 %v563, 0.5
    %v617 = vmul.f32 %v567, 0.5
    %v618 = vmul.f32 %v569, 0.5
    %v619 = vmul.f32 %v573, 0.5
    %v620 = vmul.f32 %v575, 0.5
    %v621 = vmul.f32 %v579, 0.5
    %v622 = vmul.f32 %v581, 0.5
    %v623 = vmul.f32 %v585, 0.5
    %v624 = vmul.f32 %v587, 0.5
    %v625 = vmul.f32 %v591, 0.5
    %v626 = vmul.f32 %v593, 0.5
    %v627 = vmul.f32 %v501, 0.70710677
    %v628 = vmul.f32 %v503, 0.70710677
    %v629 = vmul.f32 %v507, 0.70710677
    %v630 = vmul.f32 %v509, 0.70710677
    %v631 = vmul.f32 %v513, 0.70710677
    %v632 = vmul.f32 %v515, 0.70710677
    %v633 = vmul.f32 %v519, 0.70710677
    %v634 = vmul.f32 %v521, 0.70710677
    %v635 = vmul.f32 %v525, 0.70710677
    %v636 = vmul.f32 %v527, 0.70710677
    %v637 = vmul.f32 %v531, 0.70710677
    %v638 = vmul.f32 %v533, 0.70710677
    %v639 = vmul.f32 %v537, 0.70710677
    %v640 = vmul.f32 %v539, 0.70710677
    %v641 = vmul.f32 %v543, 0.70710677
    %v642 = vmul.f32 %v545, 0.70710677
    %v643 = vmul.f32 %v549, 0.70710677
    %v644 = vmul.f32 %v551, 0.70710677
    %v645 = vmul.f32 %v555, 0.70710677
    %v646 = vmul.f32 %v557, 0.70710677
    %v647 = vmul.f32 %v561, 0.70710677
    %v648 = vmul.f32 %v563, 0.70710677
    %v649 = vmul.f32 %v567, 0.70710677
    %v650 = vmul.f32 %v569, 0.70710677
    %v651 = vmul.f32 %v573, 0.70710677
    %v652 = vmul.f32 %v575, 0.70710677
    %v653 = vmul.f32 %v579, 0.70710677
    %v654 = vmul.f32 %v581, 0.70710677
    %v655 = vmul.f32 %v585, 0.70710677
    %v656 = vmul.f32 %v587, 0.70710677
    %v657 = vmul.f32 %v591, 0.70710677
    %v658 = vmul.f32 %v593, 0.70710677
    %v659 = verf.f32.pop %v627
    %v660 = verf.f32.pop %v628
    %v661 = verf.f32.pop %v629
    %v662 = verf.f32.pop %v630
    %v663 = verf.f32.pop %v631
    %v664 = verf.f32.pop %v632
    %v665 = verf.f32.pop %v633
    %v666 = verf.f32.pop %v634
    %v667 = verf.f32.pop %v635
    %v668 = verf.f32.pop %v636
    %v669 = verf.f32.pop %v637
    %v670 = verf.f32.pop %v638
    %v671 = verf.f32.pop %v639
    %v672 = verf.f32.pop %v640
    %v673 = verf.f32.pop %v641
    %v674 = verf.f32.pop %v642
    %v675 = verf.f32.pop %v643
    %v676 = verf.f32.pop %v644
    %v677 = verf.f32.pop %v645
    %v678 = verf.f32.pop %v646
    %v679 = verf.f32.pop %v647
    %v680 = verf.f32.pop %v648
    %v681 = verf.f32.pop %v649
    %v682 = verf.f32.pop %v650
    %v683 = verf.f32.pop %v651
    %v684 = verf.f32.pop %v652
    %v685 = verf.f32.pop %v653
    %v686 = verf.f32.pop %v654
    %v687 = verf.f32.pop %v655
    %v688 = verf.f32.pop %v656
    %v689 = verf.f32.pop %v657
    %v690 = verf.f32.pop %v658
    %v691 = vadd.f32 %v659, 1.0
    %v692 = vadd.f32 %v660, 1.0
    %v693 = vadd.f32 %v661, 1.0
    %v694 = vadd.f32 %v662, 1.0
    %v695 = vadd.f32 %v663, 1.0
    %v696 = vadd.f32 %v664, 1.0
    %v697 = vadd.f32 %v665, 1.0
    %v698 = vadd.f32 %v666, 1.0
    %v699 = vadd.f32 %v667, 1.0
    %v700 = vadd.f32 %v668, 1.0
    %v701 = vadd.f32 %v669, 1.0
    %v702 = vadd.f32 %v670, 1.0
    %v703 = vadd.f32 %v671, 1.0
    %v704 = vadd.f32 %v672, 1.0
    %v705 = vadd.f32 %v673, 1.0
    %v706 = vadd.f32 %v674, 1.0
    %v707 = vadd.f32 %v675, 1.0
    %v708 = vadd.f32 %v676, 1.0
    %v709 = vadd.f32 %v677, 1.0
    %v710 = vadd.f32 %v678, 1.0
    %v711 = vadd.f32 %v679, 1.0
    %v712 = vadd.f32 %v680, 1.0
    %v713 = vadd.f32 %v681, 1.0
    %v714 = vadd.f32 %v682, 1.0
    %v715 = vadd.f32 %v683, 1.0
    %v716 = vadd.f32 %v684, 1.0
    %v717 = vadd.f32 %v685, 1.0
    %v718 = vadd.f32 %v686, 1.0
    %v719 = vadd.f32 %v687, 1.0
    %v720 = vadd.f32 %v688, 1.0
    %v721 = vadd.f32 %v689, 1.0
    %v722 = vadd.f32 %v690, 1.0
    %v723 = vmul.f32 %v595, %v691
    %v724 = vmul.f32 %v596, %v692
    %v725 = vmul.f32 %v597, %v693
    %v726 = vmul.f32 %v598, %v694
    %v727 = vmul.f32 %v599, %v695
    %v728 = vmul.f32 %v600, %v696
    %v729 = vmul.f32 %v601, %v697
    %v730 = vmul.f32 %v602, %v698
    %v731 = vmul.f32 %v603, %v699
    %v732 = vmul.f32 %v604, %v700
    %v733 = vmul.f32 %v605, %v701
    %v734 = vmul.f32 %v606, %v702
    %v735 = vmul.f32 %v607, %v703
    %v736 = vmul.f32 %v608, %v704
    %v737 = vmul.f32 %v609, %v705
    %v738 = vmul.f32 %v610, %v706
    %v739 = vmul.f32 %v611, %v707
    %v740 = vmul.f32 %v612, %v708
    %v741 = vmul.f32 %v613, %v709
    %v742 = vmul.f32 %v614, %v710
    %v743 = vmul.f32 %v615, %v711
    %v744 = vmul.f32 %v616, %v712
    %v745 = vmul.f32 %v617, %v713
    %v746 = vmul.f32 %v618, %v714
    %v747 = vmul.f32 %v619, %v715
    %v748 = vmul.f32 %v620, %v716
    %v749 = vmul.f32 %v621, %v717
    %v750 = vmul.f32 %v622, %v718
    %v751 = vmul.f32 %v623, %v719
    %v752 = vmul.f32 %v624, %v720
    %v753 = vmul.f32 %v625, %v721
    %v754 = vmul.f32 %v626, %v722
    %v755 = vld [vmem:[#allocation3] sm:$0xff]
    %v756 = vld [vmem:[#allocation3 + $0x8] sm:$0xff]
    %v757 = vld [vmem:[#allocation3 + $0x10] sm:$0xff]
    %v758 = vld [vmem:[#allocation3 + $0x18] sm:$0xff]
    %v759 = vld [vmem:[#allocation3 + $0x20] sm:$0xff]
    %v760 = vld [vmem:[#allocation3 + $0x28] sm:$0xff]
    %v761 = vld [vmem:[#allocation3 + $0x30] sm:$0xff]
    %v762 = vld [vmem:[#allocation3 + $0x38] sm:$0xff]
    %v763 = vld [vmem:[#allocation3 + $0x40] sm:$0xff]
    %v764 = vld [vmem:[#allocation3 + $0x48] sm:$0xff]
    %v765 = vld [vmem:[#allocation3 + $0x50] sm:$0xff]
    %v766 = vld [vmem:[#allocation3 + $0x58] sm:$0xff]
    %v767 = vld [vmem:[#allocation3 + $0x60] sm:$0xff]
    %v768 = vld [vmem:[#allocation3 + $0x68] sm:$0xff]
    %v769 = vld [vmem:[#allocation3 + $0x70] sm:$0xff]
    %v770 = vld [vmem:[#allocation3 + $0x78] sm:$0xff]
    %v771 = vld [vmem:[#allocation9] sm:$0xff]
    %v772 = vld [vmem:[#allocation9 + $0x8] sm:$0xff]
    %v773 = vld [vmem:[#allocation9 + $0x10] sm:$0xff]
    %v774 = vld [vmem:[#allocation9 + $0x18] sm:$0xff]
    %v775 = vld [vmem:[#allocation9 + $0x20] sm:$0xff]
    %v776 = vld [vmem:[#allocation9 + $0x28] sm:$0xff]
    %v777 = vld [vmem:[#allocation9 + $0x30] sm:$0xff]
    %v778 = vld [vmem:[#allocation9 + $0x38] sm:$0xff]
    %v779 = vld [vmem:[#allocation9 + $0x40] sm:$0xff]
    %v780 = vld [vmem:[#allocation9 + $0x48] sm:$0xff]
    %v781 = vld [vmem:[#allocation9 + $0x50] sm:$0xff]
    %v782 = vld [vmem:[#allocation9 + $0x58] sm:$0xff]
    %v783 = vld [vmem:[#allocation9 + $0x60] sm:$0xff]
    %v784 = vld [vmem:[#allocation9 + $0x68] sm:$0xff]
    %v785 = vld [vmem:[#allocation9 + $0x70] sm:$0xff]
    %v786 = vld [vmem:[#allocation9 + $0x78] sm:$0xff]
    %v787 = vld [vmem:[#allocation9 + $0x80] sm:$0xff]
    %v788 = vld [vmem:[#allocation9 + $0x88] sm:$0xff]
    %v789 = vld [vmem:[#allocation9 + $0x90] sm:$0xff]
    %v790 = vld [vmem:[#allocation9 + $0x98] sm:$0xff]
    %v791 = vld [vmem:[#allocation9 + $0xa0] sm:$0xff]
    %v792 = vld [vmem:[#allocation9 + $0xa8] sm:$0xff]
    %v793 = vld [vmem:[#allocation9 + $0xb0] sm:$0xff]
    %v794 = vld [vmem:[#allocation9 + $0xb8] sm:$0xff]
    %v795 = vld [vmem:[#allocation9 + $0xc0] sm:$0xff]
    %v796 = vld [vmem:[#allocation9 + $0xc8] sm:$0xff]
    %v797 = vld [vmem:[#allocation9 + $0xd0] sm:$0xff]
    %v798 = vld [vmem:[#allocation9 + $0xd8] sm:$0xff]
    %v799 = vld [vmem:[#allocation9 + $0xe0] sm:$0xff]
    %v800 = vld [vmem:[#allocation9 + $0xe8] sm:$0xff]
    %v801 = vld [vmem:[#allocation9 + $0xf0] sm:$0xff]
    %v802 = vld [vmem:[#allocation9 + $0xf8] sm:$0xff]
    %803 = vmatprep.subr.mxu0 0.0
    %804 = vmatpush1.msra.mxu0 %v786
    %805 = vmatprep.subr.mxu0 0.0
    %806 = vmatpush1.msra.mxu0 %v785
    %807 = vmatprep.subr.mxu0 0.0
    %808 = vmatpush1.msra.mxu0 %v784
    %809 = vmatprep.subr.mxu0 0.0
    %810 = vmatpush1.msra.mxu0 %v783
    %811 = vmatprep.subr.mxu0 0.0
    %812 = vmatpush1.msra.mxu0 %v782
    %813 = vmatprep.subr.mxu0 0.0
    %814 = vmatpush1.msra.mxu0 %v781
    %815 = vmatprep.subr.mxu0 0.0
    %816 = vmatpush1.msra.mxu0 %v780
    %817 = vmatprep.subr.mxu0 0.0
    %818 = vmatpush1.msra.mxu0 %v779
    %819 = vmatprep.subr.mxu0 0.0
    %820 = vmatpush1.msra.mxu0 %v778
    %821 = vmatprep.subr.mxu0 0.0
    %822 = vmatpush1.msra.mxu0 %v777
    %823 = vmatprep.subr.mxu0 0.0
    %824 = vmatpush1.msra.mxu0 %v776
    %825 = vmatprep.subr.mxu0 0.0
    %826 = vmatpush1.msra.mxu0 %v775
    %827 = vmatprep.subr.mxu0 0.0
    %828 = vmatpush1.msra.mxu0 %v774
    %829 = vmatprep.subr.mxu0 0.0
    %830 = vmatpush1.msra.mxu0 %v773
    %831 = vmatprep.subr.mxu0 0.0
    %832 = vmatpush1.msra.mxu0 %v772
    %833 = vmatprep.subr.mxu0 0.0
    %834 = vmatpush1.msra.mxu0 %v771
    %835 = vmatprep.subr.mxu0 0.0
    %836 = vmatpush2.msra.mxu0 %v802
    %837 = vmatprep.subr.mxu0 0.0
    %838 = vmatpush2.msra.mxu0 %v801
    %839 = vmatprep.subr.mxu0 0.0
    %840 = vmatpush2.msra.mxu0 %v800
    %841 = vmatprep.subr.mxu0 0.0
    %842 = vmatpush2.msra.mxu0 %v799
    %843 = vmatprep.subr.mxu0 0.0
    %844 = vmatpush2.msra.mxu0 %v798
    %845 = vmatprep.subr.mxu0 0.0
    %846 = vmatpush2.msra.mxu0 %v797
    %847 = vmatprep.subr.mxu0 0.0
    %848 = vmatpush2.msra.mxu0 %v796
    %849 = vmatprep.subr.mxu0 0.0
    %850 = vmatpush2.msra.mxu0 %v795
    %851 = vmatprep.subr.mxu0 0.0
    %852 = vmatpush2.msra.mxu0 %v794
    %853 = vmatprep.subr.mxu0 0.0
    %854 = vmatpush2.msra.mxu0 %v793
    %855 = vmatprep.subr.mxu0 0.0
    %856 = vmatpush2.msra.mxu0 %v792
    %857 = vmatprep.subr.mxu0 0.0
    %858 = vmatpush2.msra.mxu0 %v791
    %859 = vmatprep.subr.mxu0 0.0
    %860 = vmatpush2.msra.mxu0 %v790
    %861 = vmatprep.subr.mxu0 0.0
    %862 = vmatpush2.msra.mxu0 %v789
    %863 = vmatprep.subr.mxu0 0.0
    %864 = vmatpush2.msra.mxu0 %v788
    %865 = vmatprep.subr.mxu0 0.0
    %866 = vmatpush2.msra.mxu0 %v787
    %867 = vmatprep.mubr.f32.mxu0 %v724
    %868 = vmatmul.mubr.f32.gmra.mxu0 %v723
    %v869 = vpop.f32.mrf.mxu0
    %v870 = vadd.f32 0.0, %v869
    %v871 = vpop.f32.mrf.mxu0
    %872 = vmatprep.mubr.f32.mxu0 %v726
    %873 = vmatmul.mubr.f32.gmra.mxu0 %v725
    %v874 = vpop.f32.mrf.mxu0
    %v875 = vadd.f32 0.0, %v874
    %v876 = vpop.f32.mrf.mxu0
    %877 = vmatprep.mubr.f32.mxu0 %v728
    %878 = vmatmul.mubr.f32.gmra.mxu0 %v727
    %v879 = vpop.f32.mrf.mxu0
    %v880 = vadd.f32 0.0, %v879
    %v881 = vpop.f32.mrf.mxu0
    %882 = vmatprep.mubr.f32.mxu0 %v730
    %883 = vmatmul.mubr.f32.gmra.mxu0 %v729
    %v884 = vpop.f32.mrf.mxu0
    %v885 = vadd.f32 0.0, %v884
    %v886 = vpop.f32.mrf.mxu0
    %887 = vmatprep.mubr.f32.mxu0 %v732
    %888 = vmatmul.mubr.f32.gmra.mxu0 %v731
    %v889 = vpop.f32.mrf.mxu0
    %v890 = vadd.f32 0.0, %v889
    %v891 = vpop.f32.mrf.mxu0
    %892 = vmatprep.mubr.f32.mxu0 %v734
    %893 = vmatmul.mubr.f32.gmra.mxu0 %v733
    %v894 = vpop.f32.mrf.mxu0
    %v895 = vadd.f32 0.0, %v894
    %v896 = vpop.f32.mrf.mxu0
    %897 = vmatprep.mubr.f32.mxu0 %v736
    %898 = vmatmul.mubr.f32.gmra.mxu0 %v735
    %v899 = vpop.f32.mrf.mxu0
    %v900 = vadd.f32 0.0, %v899
    %v901 = vpop.f32.mrf.mxu0
    %902 = vmatprep.mubr.f32.mxu0 %v738
    %903 = vmatmul.mubr.f32.gmra.mxu0 %v737
    %v904 = vpop.f32.mrf.mxu0
    %v905 = vadd.f32 0.0, %v904
    %v906 = vpop.f32.mrf.mxu0
    %907 = vmatprep.mubr.f32.mxu0 %v740
    %908 = vmatmul.mubr.f32.gmra.mxu0 %v739
    %v909 = vpop.f32.mrf.mxu0
    %v910 = vadd.f32 0.0, %v909
    %v911 = vpop.f32.mrf.mxu0
    %912 = vmatprep.mubr.f32.mxu0 %v742
    %913 = vmatmul.mubr.f32.gmra.mxu0 %v741
    %v914 = vpop.f32.mrf.mxu0
    %v915 = vadd.f32 0.0, %v914
    %v916 = vpop.f32.mrf.mxu0
    %917 = vmatprep.mubr.f32.mxu0 %v744
    %918 = vmatmul.mubr.f32.gmra.mxu0 %v743
    %v919 = vpop.f32.mrf.mxu0
    %v920 = vadd.f32 0.0, %v919
    %v921 = vpop.f32.mrf.mxu0
    %922 = vmatprep.mubr.f32.mxu0 %v746
    %923 = vmatmul.mubr.f32.gmra.mxu0 %v745
    %v924 = vpop.f32.mrf.mxu0
    %v925 = vadd.f32 0.0, %v924
    %v926 = vpop.f32.mrf.mxu0
    %927 = vmatprep.mubr.f32.mxu0 %v748
    %928 = vmatmul.mubr.f32.gmra.mxu0 %v747
    %v929 = vpop.f32.mrf.mxu0
    %v930 = vadd.f32 0.0, %v929
    %v931 = vpop.f32.mrf.mxu0
    %932 = vmatprep.mubr.f32.mxu0 %v750
    %933 = vmatmul.mubr.f32.gmra.mxu0 %v749
    %v934 = vpop.f32.mrf.mxu0
    %v935 = vadd.f32 0.0, %v934
    %v936 = vpop.f32.mrf.mxu0
    %937 = vmatprep.mubr.f32.mxu0 %v752
    %938 = vmatmul.mubr.f32.gmra.mxu0 %v751
    %v939 = vpop.f32.mrf.mxu0
    %v940 = vadd.f32 0.0, %v939
    %v941 = vpop.f32.mrf.mxu0
    %942 = vmatprep.mubr.f32.mxu0 %v754
    %943 = vmatmul.mubr.f32.gmra.mxu0 %v753
    %v944 = vpop.f32.mrf.mxu0
    %v945 = vadd.f32 0.0, %v944
    %v946 = vpop.f32.mrf.mxu0
    %947 = vdwg.mxu0
    %v948 = vadd.f32 %v755, %v870
    %v949 = vadd.f32 %v756, %v875
    %v950 = vadd.f32 %v757, %v880
    %v951 = vadd.f32 %v758, %v885
    %v952 = vadd.f32 %v759, %v890
    %v953 = vadd.f32 %v760, %v895
    %v954 = vadd.f32 %v761, %v900
    %v955 = vadd.f32 %v762, %v905
    %v956 = vadd.f32 %v763, %v910
    %v957 = vadd.f32 %v764, %v915
    %v958 = vadd.f32 %v765, %v920
    %v959 = vadd.f32 %v766, %v925
    %v960 = vadd.f32 %v767, %v930
    %v961 = vadd.f32 %v768, %v935
    %v962 = vadd.f32 %v769, %v940
    %v963 = vadd.f32 %v770, %v945
    %964 = vst [vmem:[#allocation3] sm:$0xff] %v948
    %965 = vst [vmem:[#allocation3 + $0x8] sm:$0xff] %v949
    %966 = vst [vmem:[#allocation3 + $0x10] sm:$0xff] %v950
    %967 = vst [vmem:[#allocation3 + $0x18] sm:$0xff] %v951
    %968 = vst [vmem:[#allocation3 + $0x20] sm:$0xff] %v952
    %969 = vst [vmem:[#allocation3 + $0x28] sm:$0xff] %v953
    %970 = vst [vmem:[#allocation3 + $0x30] sm:$0xff] %v954
    %971 = vst [vmem:[#allocation3 + $0x38] sm:$0xff] %v955
    %972 = vst [vmem:[#allocation3 + $0x40] sm:$0xff] %v956
    %973 = vst [vmem:[#allocation3 + $0x48] sm:$0xff] %v957
    %974 = vst [vmem:[#allocation3 + $0x50] sm:$0xff] %v958
    %975 = vst [vmem:[#allocation3 + $0x58] sm:$0xff] %v959
    %976 = vst [vmem:[#allocation3 + $0x60] sm:$0xff] %v960
    %977 = vst [vmem:[#allocation3 + $0x68] sm:$0xff] %v961
    %978 = vst [vmem:[#allocation3 + $0x70] sm:$0xff] %v962
    %979 = vst [vmem:[#allocation3 + $0x78] sm:$0xff] %v963
    // Predicated region
    $region46: #{tpu_custom_call.1} parent=1 // pred_check
      %p980 = pneg %p68
    $region47: #{tpu_custom_call.1} parent=1 // pred_check_branch
      %982 = sbr.rel (%p980) target = $region49
    $region48: #{tpu_custom_call.1} parent=1 // pred_region
      %v983 = vld [vmem:[#allocation3] sm:$0xff]
      %v984 = vld [vmem:[#allocation3 + $0x8] sm:$0xff]
      %v985 = vld [vmem:[#allocation3 + $0x10] sm:$0xff]
      %v986 = vld [vmem:[#allocation3 + $0x18] sm:$0xff]
      %v987 = vld [vmem:[#allocation3 + $0x20] sm:$0xff]
      %v988 = vld [vmem:[#allocation3 + $0x28] sm:$0xff]
      %v989 = vld [vmem:[#allocation3 + $0x30] sm:$0xff]
      %v990 = vld [vmem:[#allocation3 + $0x38] sm:$0xff]
      %v991 = vld [vmem:[#allocation3 + $0x40] sm:$0xff]
      %v992 = vld [vmem:[#allocation3 + $0x48] sm:$0xff]
      %v993 = vld [vmem:[#allocation3 + $0x50] sm:$0xff]
      %v994 = vld [vmem:[#allocation3 + $0x58] sm:$0xff]
      %v995 = vld [vmem:[#allocation3 + $0x60] sm:$0xff]
      %v996 = vld [vmem:[#allocation3 + $0x68] sm:$0xff]
      %v997 = vld [vmem:[#allocation3 + $0x70] sm:$0xff]
      %v998 = vld [vmem:[#allocation3 + $0x78] sm:$0xff]
      %v999 = vld [vmem:[%s4] sm:$0x1]
      %v1001 = vlaneseq
      %v1002 = vshrl.u32 %v1001, 7
      %v1003 = vsub.s32 0, %v1002
      %v1004 = vrot.slane %v999, %v1003
      %v1006 = vadd.f32 %v983, %v1004
      %v1007 = vadd.f32 %v984, %v1004
      %v1008 = vadd.f32 %v985, %v1004
      %v1009 = vadd.f32 %v986, %v1004
      %v1010 = vadd.f32 %v987, %v1004
      %v1011 = vadd.f32 %v988, %v1004
      %v1012 = vadd.f32 %v989, %v1004
      %v1013 = vadd.f32 %v990, %v1004
      %v1014 = vadd.f32 %v991, %v1004
      %v1015 = vadd.f32 %v992, %v1004
      %v1016 = vadd.f32 %v993, %v1004
      %v1017 = vadd.f32 %v994, %v1004
      %v1018 = vadd.f32 %v995, %v1004
      %v1019 = vadd.f32 %v996, %v1004
      %v1020 = vadd.f32 %v997, %v1004
      %v1021 = vadd.f32 %v998, %v1004
      %v1022 = vld [vmem:[#allocation4] sm:$0xff]
      %v1023 = vld [vmem:[#allocation4 + $0x8] sm:$0xff]
      %v1024 = vld [vmem:[#allocation4 + $0x10] sm:$0xff]
      %v1025 = vld [vmem:[#allocation4 + $0x18] sm:$0xff]
      %v1026 = vld [vmem:[#allocation4 + $0x20] sm:$0xff]
      %v1027 = vld [vmem:[#allocation4 + $0x28] sm:$0xff]
      %v1028 = vld [vmem:[#allocation4 + $0x30] sm:$0xff]
      %v1029 = vld [vmem:[#allocation4 + $0x38] sm:$0xff]
      %v1030 = vld [vmem:[#allocation4 + $0x40] sm:$0xff]
      %v1031 = vld [vmem:[#allocation4 + $0x48] sm:$0xff]
      %v1032 = vld [vmem:[#allocation4 + $0x50] sm:$0xff]
      %v1033 = vld [vmem:[#allocation4 + $0x58] sm:$0xff]
      %v1034 = vld [vmem:[#allocation4 + $0x60] sm:$0xff]
      %v1035 = vld [vmem:[#allocation4 + $0x68] sm:$0xff]
      %v1036 = vld [vmem:[#allocation4 + $0x70] sm:$0xff]
      %v1037 = vld [vmem:[#allocation4 + $0x78] sm:$0xff]
      %v1038 = vadd.f32 %v1006, %v1022
      %v1039 = vadd.f32 %v1007, %v1023
      %v1040 = vadd.f32 %v1008, %v1024
      %v1041 = vadd.f32 %v1009, %v1025
      %v1042 = vadd.f32 %v1010, %v1026
      %v1043 = vadd.f32 %v1011, %v1027
      %v1044 = vadd.f32 %v1012, %v1028
      %v1045 = vadd.f32 %v1013, %v1029
      %v1046 = vadd.f32 %v1014, %v1030
      %v1047 = vadd.f32 %v1015, %v1031
      %v1048 = vadd.f32 %v1016, %v1032
      %v1049 = vadd.f32 %v1017, %v1033
      %v1050 = vadd.f32 %v1018, %v1034
      %v1051 = vadd.f32 %v1019, %v1035
      %v1052 = vadd.f32 %v1020, %v1036
      %v1053 = vadd.f32 %v1021, %v1037
      %1054 = vst [vmem:[#allocation10] sm:$0xff] %v1038
      %1055 = vst [vmem:[#allocation10 + $0x8] sm:$0xff] %v1039
      %1056 = vst [vmem:[#allocation10 + $0x10] sm:$0xff] %v1040
      %1057 = vst [vmem:[#allocation10 + $0x18] sm:$0xff] %v1041
      %1058 = vst [vmem:[#allocation10 + $0x20] sm:$0xff] %v1042
      %1059 = vst [vmem:[#allocation10 + $0x28] sm:$0xff] %v1043
      %1060 = vst [vmem:[#allocation10 + $0x30] sm:$0xff] %v1044
      %1061 = vst [vmem:[#allocation10 + $0x38] sm:$0xff] %v1045
      %1062 = vst [vmem:[#allocation10 + $0x40] sm:$0xff] %v1046
      %1063 = vst [vmem:[#allocation10 + $0x48] sm:$0xff] %v1047
      %1064 = vst [vmem:[#allocation10 + $0x50] sm:$0xff] %v1048
      %1065 = vst [vmem:[#allocation10 + $0x58] sm:$0xff] %v1049
      %1066 = vst [vmem:[#allocation10 + $0x60] sm:$0xff] %v1050
      %1067 = vst [vmem:[#allocation10 + $0x68] sm:$0xff] %v1051
      %1068 = vst [vmem:[#allocation10 + $0x70] sm:$0xff] %v1052
      %1069 = vst [vmem:[#allocation10 + $0x78] sm:$0xff] %v1053
    $region49: #{tpu_custom_call.1} parent=1 // pred_fallthru
      _
    // Predicated region
    $region50: #{tpu_custom_call.1} parent=1 // pred_check
      _
    $region51: #{tpu_custom_call.1} parent=1 // pred_check_branch
      %1071 = sbr.rel (0) target = $region53
    $region52: #{tpu_custom_call.1} parent=1 // pred_region
      %s1073 = ssub.s32 2048, 2048
      %1074 = vsyncadd [#allocation6], %s1073
      %s1075 = sshll.u32 [#allocation10], 4
      %s1076 = int_to_ptr.vmem [resolvable:$true] %s1075
      %1081 = dma.vmem_to_hbm [thread:$0]  %s1076, 2048, %s7, [#allocation6], 128, 128, 8
    $region53: #{tpu_custom_call.1} parent=1 // pred_fallthru
      _
    // Predicated region
    $region54: #{tpu_custom_call.1} parent=1 // pred_check
      _
    $region55: #{tpu_custom_call.1} parent=1 // pred_check_branch
      %1083 = sbr.rel (0) target = $region57
    $region56: #{tpu_custom_call.1} parent=1 // pred_region
      %1084 = dma.done [#allocation6], 2048
    $region57: #{tpu_custom_call.1} parent=1 // pred_fallthru
      _
    %1085 = vsyncpa [#allocation5], 1
    %1086 = vsyncpa [#allocation8], 1
    %1087 = vsyncpa [#allocation6], 1

// kernel: tpu_custom_call.1
$region0: #{tpu_custom_call.1}
  #allocation0 [shape = 'u32[]', space=smem, size = 0x4, offset = 0x4, fixed_abs, tag = 'smem constant byte address 0x4 - core index']
  #allocation1 [shape = 'u32[144,128]{1,0:T(1,128)}', space=vmem, size = 0x12000, scoped, tag = 'internal scratch']
  #allocation2 [shape = 'f32[128,128]{1,0:T(8,128)}', space=vmem, size = 0x10000, scoped, tag = 'scratch operand']
  #allocation3 [shape = 'f32[128,128]{1,0:T(8,128)}', space=vmem, size = 0x10000, scoped, tag = 'scratch operand']
  %s0 = inlined_call_operand.hbm [shape: f32[128,128], index: 0, kind: input, shape index: {}]
  %s1 = inlined_call_operand.hbm [shape: f32[128,256], index: 1, kind: input, shape index: {}]
  %s2 = inlined_call_operand.vmem [shape: f32[1,256], index: 2, kind: input, shape index: {}]
  %s3 = inlined_call_operand.hbm [shape: f32[256,128], index: 3, kind: input, shape index: {}]
  %s4 = inlined_call_operand.vmem [shape: f32[1,128], index: 4, kind: input, shape index: {}]
  %s5 = inlined_call_operand.vmem [shape: f32[1,128], index: 5, kind: input, shape index: {}]
  %s6 = inlined_call_operand.vmem [shape: f32[1,128], index: 6, kind: input, shape index: {}]
  %s7 = inlined_call_operand.hbm [shape: f32[128,128], index: 7, kind: output, shape index: {}]
  %s8 = sld [smem:[#allocation0]]
  $region58: #{tpu_custom_call.1} parent=0
    _
  %s10 = ssub.s32 1, %s8
  %s11 = scalar_select 0, %s10, %s8
  $region1: #{tpu_custom_call.1} parent=0
    #allocation4 [shape = 'u8[65536]{0}', space=vmem, size = 0x10000, scoped, tag = 'input window, operand 0, single buffered']
    #allocation5 [shape = 's32[1]{0}', space=sflag, size = 0x4, scoped, tag = 'scoped memory for tpu_custom_call.1']
    #allocation6 [shape = 's32[1]{0}', space=sflag, size = 0x4, scoped, tag = 'scoped memory for tpu_custom_call.1']
    #allocation7 [shape = 'u8[131072]{0}', space=vmem, size = 0x20000, scoped, tag = 'input window, operand 1, single buffered']
    #allocation8 [shape = 's32[1]{0}', space=sflag, size = 0x4, scoped, tag = 'scoped memory for tpu_custom_call.1']
    #allocation9 [shape = 'u8[131072]{0}', space=vmem, size = 0x20000, scoped, tag = 'input window, operand 3, single buffered']
    #allocation10 [shape = 'u8[65536]{0}', space=vmem, size = 0x10000, scoped, tag = 'output window, operand 0, single buffered']
    %12 = vsyncpa [#allocation5], 0
    %13 = vsyncpa [#allocation8], 0
    %14 = vsyncpa [#allocation6], 0
    // Predicated region
    $region2: #{tpu_custom_call.1} parent=1 // pred_check
      _
    $region3: #{tpu_custom_call.1} parent=1 // pred_check_branch
      %16 = sbr.rel (0) target = $region5
    $region4: #{tpu_custom_call.1} parent=1 // pred_region
      %s18 = ssub.s32 2048, 2048
      %19 = vsyncadd [#allocation5], %s18
      %s20 = sshll.u32 [#allocation4], 4
      %s21 = int_to_ptr.vmem [resolvable:$true] %s20
      %26 = dma.hbm_to_vmem [thread:$0]  %s0, 2048, %s21, [#allocation5], 128, 128, 8
    $region5: #{tpu_custom_call.1} parent=1 // pred_fallthru
      _
    // Predicated region
    $region6: #{tpu_custom_call.1} parent=1 // pred_check
      _
    $region7: #{tpu_custom_call.1} parent=1 // pred_check_branch
      %28 = sbr.rel (0) target = $region9
    $region8: #{tpu_custom_call.1} parent=1 // pred_region
      %s30 = ssub.s32 4096, 4096
      %31 = vsyncadd [#allocation8], %s30
      %s32 = sshll.u32 [#allocation7], 4
      %s33 = int_to_ptr.vmem [resolvable:$true] %s32
      %38 = dma.hbm_to_vmem [thread:$0]  %s1, 4096, %s33, [#allocation8], 256, 256, 16
    $region9: #{tpu_custom_call.1} parent=1 // pred_fallthru
      _
    // Predicated region
    $region10: #{tpu_custom_call.1} parent=1 // pred_check
      _
    $region11: #{tpu_custom_call.1} parent=1 // pred_check_branch
      %40 = sbr.rel (0) target = $region13
    $region12: #{tpu_custom_call.1} parent=1 // pred_region
      _
    $region13: #{tpu_custom_call.1} parent=1 // pred_fallthru
      _
    // Predicated region
    $region14: #{tpu_custom_call.1} parent=1 // pred_check
      _
    $region15: #{tpu_custom_call.1} parent=1 // pred_check_branch
      %42 = sbr.rel (0) target = $region17
    $region16: #{tpu_custom_call.1} parent=1 // pred_region
      %s44 = ssub.s32 4096, 4096
      %45 = vsyncadd [#allocation8], %s44
      %s46 = sshll.u32 [#allocation9], 4
      %s47 = int_to_ptr.vmem [resolvable:$true] %s46
      %52 = dma.hbm_to_vmem [thread:$0]  %s3, 4096, %s47, [#allocation8], 128, 128, 8
    $region17: #{tpu_custom_call.1} parent=1 // pred_fallthru
      _
    // Predicated region
    $region18: #{tpu_custom_call.1} parent=1 // pred_check
      _
    $region19: #{tpu_custom_call.1} parent=1 // pred_check_branch
      %54 = sbr.rel (0) target = $region21
    $region20: #{tpu_custom_call.1} parent=1 // pred_region
      _
    $region21: #{tpu_custom_call.1} parent=1 // pred_fallthru
      _
    // Predicated region
    $region22: #{tpu_custom_call.1} parent=1 // pred_check
      _
    $region23: #{tpu_custom_call.1} parent=1 // pred_check_branch
      %56 = sbr.rel (0) target = $region25
    $region24: #{tpu_custom_call.1} parent=1 // pred_region
      _
    $region25: #{tpu_custom_call.1} parent=1 // pred_fallthru
      _
    // Predicated region
    $region26: #{tpu_custom_call.1} parent=1 // pred_check
      _
    $region27: #{tpu_custom_call.1} parent=1 // pred_check_branch
      %58 = sbr.rel (0) target = $region29
    $region28: #{tpu_custom_call.1} parent=1 // pred_region
      _
    $region29: #{tpu_custom_call.1} parent=1 // pred_fallthru
      _
    // Predicated region
    $region30: #{tpu_custom_call.1} parent=1 // pred_check
      _
    $region31: #{tpu_custom_call.1} parent=1 // pred_check_branch
      %60 = sbr.rel (0) target = $region33
    $region32: #{tpu_custom_call.1} parent=1 // pred_region
      %61 = dma.done [#allocation5], 2048
    $region33: #{tpu_custom_call.1} parent=1 // pred_fallthru
      _
    // Predicated region
    $region34: #{tpu_custom_call.1} parent=1 // pred_check
      _
    $region35: #{tpu_custom_call.1} parent=1 // pred_check_branch
      %63 = sbr.rel (0) target = $region37
    $region36: #{tpu_custom_call.1} parent=1 // pred_region
      %64 = dma.done [#allocation8], 4096
    $region37: #{tpu_custom_call.1} parent=1 // pred_fallthru
      _
    // Predicated region
    $region38: #{tpu_custom_call.1} parent=1 // pred_check
      _
    $region39: #{tpu_custom_call.1} parent=1 // pred_check_branch
      %66 = sbr.rel (0) target = $region41
    $region40: #{tpu_custom_call.1} parent=1 // pred_region
      %67 = dma.done [#allocation8], 4096
    $region41: #{tpu_custom_call.1} parent=1 // pred_fallthru
      _
    %p68 = scmp.eq.s32.totalorder 0, 0
    // Predicated region
    $region42: #{tpu_custom_call.1} parent=1 // pred_check
      %p69 = pneg %p68
    $region43: #{tpu_custom_call.1} parent=1 // pred_check_branch
      %71 = sbr.rel (%p69) target = $region45
    $region44: #{tpu_custom_call.1} parent=1 // pred_region
      %v72 = vld [vmem:[#allocation4] sm:$0xff]
      %v73 = vld [vmem:[#allocation4 + $0x8] sm:$0xff]
      %v74 = vld [vmem:[#allocation4 + $0x10] sm:$0xff]
      %v75 = vld [vmem:[#allocation4 + $0x18] sm:$0xff]
      %v76 = vld [vmem:[#allocation4 + $0x20] sm:$0xff]
      %v77 = vld [vmem:[#allocation4 + $0x28] sm:$0xff]
      %v78 = vld [vmem:[#allocation4 + $0x30] sm:$0xff]
      %v79 = vld [vmem:[#allocation4 + $0x38] sm:$0xff]
      %v80 = vld [vmem:[#allocation4 + $0x40] sm:$0xff]
      %v81 = vld [vmem:[#allocation4 + $0x48] sm:$0xff]
      %v82 = vld [vmem:[#allocation4 + $0x50] sm:$0xff]
      %v83 = vld [vmem:[#allocation4 + $0x58] sm:$0xff]
      %v84 = vld [vmem:[#allocation4 + $0x60] sm:$0xff]
      %v85 = vld [vmem:[#allocation4 + $0x68] sm:$0xff]
      %v86 = vld [vmem:[#allocation4 + $0x70] sm:$0xff]
      %v87 = vld [vmem:[#allocation4 + $0x78] sm:$0xff]
      %88 = vadd.xlane.f32.xlu0 %v72
      %v89 = vpop.xlane.xlu0 %88
      %90 = vadd.xlane.f32.xlu0 %v73
      %v91 = vpop.xlane.xlu0 %90
      %92 = vadd.xlane.f32.xlu0 %v74
      %v93 = vpop.xlane.xlu0 %92
      %94 = vadd.xlane.f32.xlu0 %v75
      %v95 = vpop.xlane.xlu0 %94
      %96 = vadd.xlane.f32.xlu0 %v76
      %v97 = vpop.xlane.xlu0 %96
      %98 = vadd.xlane.f32.xlu0 %v77
      %v99 = vpop.xlane.xlu0 %98
      %100 = vadd.xlane.f32.xlu0 %v78
      %v101 = vpop.xlane.xlu0 %100
      %102 = vadd.xlane.f32.xlu0 %v79
      %v103 = vpop.xlane.xlu0 %102
      %104 = vadd.xlane.f32.xlu0 %v80
      %v105 = vpop.xlane.xlu0 %104
      %106 = vadd.xlane.f32.xlu0 %v81
      %v107 = vpop.xlane.xlu0 %106
      %108 = vadd.xlane.f32.xlu0 %v82
      %v109 = vpop.xlane.xlu0 %108
      %110 = vadd.xlane.f32.xlu0 %v83
      %v111 = vpop.xlane.xlu0 %110
      %112 = vadd.xlane.f32.xlu0 %v84
      %v113 = vpop.xlane.xlu0 %112
      %114 = vadd.xlane.f32.xlu0 %v85
      %v115 = vpop.xlane.xlu0 %114
      %116 = vadd.xlane.f32.xlu0 %v86
      %v117 = vpop.xlane.xlu0 %116
      %118 = vadd.xlane.f32.xlu0 %v87
      %v119 = vpop.xlane.xlu0 %118
      %v120 = vmul.f32 %v89, 0.0078125
      %v121 = vmul.f32 %v91, 0.0078125
      %v122 = vmul.f32 %v93, 0.0078125
      %v123 = vmul.f32 %v95, 0.0078125
      %v124 = vmul.f32 %v97, 0.0078125
      %v125 = vmul.f32 %v99, 0.0078125
      %v126 = vmul.f32 %v101, 0.0078125
      %v127 = vmul.f32 %v103, 0.0078125
      %v128 = vmul.f32 %v105, 0.0078125
      %v129 = vmul.f32 %v107, 0.0078125
      %v130 = vmul.f32 %v109, 0.0078125
      %v131 = vmul.f32 %v111, 0.0078125
      %v132 = vmul.f32 %v113, 0.0078125
      %v133 = vmul.f32 %v115, 0.0078125
      %v134 = vmul.f32 %v117, 0.0078125
      %v135 = vmul.f32 %v119, 0.0078125
      %v136 = vmul.f32 %v72, %v72
      %v137 = vmul.f32 %v73, %v73
      %v138 = vmul.f32 %v74, %v74
      %v139 = vmul.f32 %v75, %v75
      %v140 = vmul.f32 %v76, %v76
      %v141 = vmul.f32 %v77, %v77
      %v142 = vmul.f32 %v78, %v78
      %v143 = vmul.f32 %v79, %v79
      %v144 = vmul.f32 %v80, %v80
      %v145 = vmul.f32 %v81, %v81
      %v146 = vmul.f32 %v82, %v82
      %v147 = vmul.f32 %v83, %v83
      %v148 = vmul.f32 %v84, %v84
      %v149 = vmul.f32 %v85, %v85
      %v150 = vmul.f32 %v86, %v86
      %v151 = vmul.f32 %v87, %v87
      %152 = vadd.xlane.f32.xlu0 %v136
      %v153 = vpop.xlane.xlu0 %152
      %154 = vadd.xlane.f32.xlu0 %v137
      %v155 = vpop.xlane.xlu0 %154
      %156 = vadd.xlane.f32.xlu0 %v138
      %v157 = vpop.xlane.xlu0 %156
      %158 = vadd.xlane.f32.xlu0 %v139
      %v159 = vpop.xlane.xlu0 %158
      %160 = vadd.xlane.f32.xlu0 %v140
      %v161 = vpop.xlane.xlu0 %160
      %162 = vadd.xlane.f32.xlu0 %v141
      %v163 = vpop.xlane.xlu0 %162
      %164 = vadd.xlane.f32.xlu0 %v142
      %v165 = vpop.xlane.xlu0 %164
      %166 = vadd.xlane.f32.xlu0 %v143
      %v167 = vpop.xlane.xlu0 %166
      %168 = vadd.xlane.f32.xlu0 %v144
      %v169 = vpop.xlane.xlu0 %168
      %170 = vadd.xlane.f32.xlu0 %v145
      %v171 = vpop.xlane.xlu0 %170
      %172 = vadd.xlane.f32.xlu0 %v146
      %v173 = vpop.xlane.xlu0 %172
      %174 = vadd.xlane.f32.xlu0 %v147
      %v175 = vpop.xlane.xlu0 %174
      %176 = vadd.xlane.f32.xlu0 %v148
      %v177 = vpop.xlane.xlu0 %176
      %178 = vadd.xlane.f32.xlu0 %v149
      %v179 = vpop.xlane.xlu0 %178
      %180 = vadd.xlane.f32.xlu0 %v150
      %v181 = vpop.xlane.xlu0 %180
      %182 = vadd.xlane.f32.xlu0 %v151
      %v183 = vpop.xlane.xlu0 %182
      %v184 = vmul.f32 %v153, 0.0078125
      %v185 = vmul.f32 %v155, 0.0078125
      %v186 = vmul.f32 %v157, 0.0078125
      %v187 = vmul.f32 %v159, 0.0078125
      %v188 = vmul.f32 %v161, 0.0078125
      %v189 = vmul.f32 %v163, 0.0078125
      %v190 = vmul.f32 %v165, 0.0078125
      %v191 = vmul.f32 %v167, 0.0078125
      %v192 = vmul.f32 %v169, 0.0078125
      %v193 = vmul.f32 %v171, 0.0078125
      %v194 = vmul.f32 %v173, 0.0078125
      %v195 = vmul.f32 %v175, 0.0078125
      %v196 = vmul.f32 %v177, 0.0078125
      %v197 = vmul.f32 %v179, 0.0078125
      %v198 = vmul.f32 %v181, 0.0078125
      %v199 = vmul.f32 %v183, 0.0078125
      %v200 = vmul.f32 %v120, %v120
      %v201 = vmul.f32 %v121, %v121
      %v202 = vmul.f32 %v122, %v122
      %v203 = vmul.f32 %v123, %v123
      %v204 = vmul.f32 %v124, %v124
      %v205 = vmul.f32 %v125, %v125
      %v206 = vmul.f32 %v126, %v126
      %v207 = vmul.f32 %v127, %v127
      %v208 = vmul.f32 %v128, %v128
      %v209 = vmul.f32 %v129, %v129
      %v210 = vmul.f32 %v130, %v130
      %v211 = vmul.f32 %v131, %v131
      %v212 = vmul.f32 %v132, %v132
      %v213 = vmul.f32 %v133, %v133
      %v214 = vmul.f32 %v134, %v134
      %v215 = vmul.f32 %v135, %v135
      %v216 = vsub.f32 %v184, %v200
      %v217 = vsub.f32 %v185, %v201
      %v218 = vsub.f32 %v186, %v202
      %v219 = vsub.f32 %v187, %v203
      %v220 = vsub.f32 %v188, %v204
      %v221 = vsub.f32 %v189, %v205
      %v222 = vsub.f32 %v190, %v206
      %v223 = vsub.f32 %v191, %v207
      %v224 = vsub.f32 %v192, %v208
      %v225 = vsub.f32 %v193, %v209
      %v226 = vsub.f32 %v194, %v210
      %v227 = vsub.f32 %v195, %v211
      %v228 = vsub.f32 %v196, %v212
      %v229 = vsub.f32 %v197, %v213
      %v230 = vsub.f32 %v198, %v214
      %v231 = vsub.f32 %v199, %v215
      %v232 = vadd.f32 %v216, 1e-06
      %v233 = vadd.f32 %v217, 1e-06
      %v234 = vadd.f32 %v218, 1e-06
      %v235 = vadd.f32 %v219, 1e-06
      %v236 = vadd.f32 %v220, 1e-06
      %v237 = vadd.f32 %v221, 1e-06
      %v238 = vadd.f32 %v222, 1e-06
      %v239 = vadd.f32 %v223, 1e-06
      %v240 = vadd.f32 %v224, 1e-06
      %v241 = vadd.f32 %v225, 1e-06
      %v242 = vadd.f32 %v226, 1e-06
      %v243 = vadd.f32 %v227, 1e-06
      %v244 = vadd.f32 %v228, 1e-06
      %v245 = vadd.f32 %v229, 1e-06
      %v246 = vadd.f32 %v230, 1e-06
      %v247 = vadd.f32 %v231, 1e-06
      %v248 = vrsqrt.pop %v232
      %v249 = vrsqrt.pop %v233
      %v250 = vrsqrt.pop %v234
      %v251 = vrsqrt.pop %v235
      %v252 = vrsqrt.pop %v236
      %v253 = vrsqrt.pop %v237
      %v254 = vrsqrt.pop %v238
      %v255 = vrsqrt.pop %v239
      %v256 = vrsqrt.pop %v240
      %v257 = vrsqrt.pop %v241
      %v258 = vrsqrt.pop %v242
      %v259 = vrsqrt.pop %v243
      %v260 = vrsqrt.pop %v244
      %v261 = vrsqrt.pop %v245
      %v262 = vrsqrt.pop %v246
      %v263 = vrsqrt.pop %v247
      %v264 = vld [vmem:[%s5] sm:$0x1]
      %v265 = vld [vmem:[%s6] sm:$0x1]
      %v266 = vsub.f32 %v72, %v120
      %v267 = vsub.f32 %v73, %v121
      %v268 = vsub.f32 %v74, %v122
      %v269 = vsub.f32 %v75, %v123
      %v270 = vsub.f32 %v76, %v124
      %v271 = vsub.f32 %v77, %v125
      %v272 = vsub.f32 %v78, %v126
      %v273 = vsub.f32 %v79, %v127
      %v274 = vsub.f32 %v80, %v128
      %v275 = vsub.f32 %v81, %v129
      %v276 = vsub.f32 %v82, %v130
      %v277 = vsub.f32 %v83, %v131
      %v278 = vsub.f32 %v84, %v132
      %v279 = vsub.f32 %v85, %v133
      %v280 = vsub.f32 %v86, %v134
      %v281 = vsub.f32 %v87, %v135
      %v282 = vmul.f32 %v266, %v248
      %v283 = vmul.f32 %v267, %v249
      %v284 = vmul.f32 %v268, %v250
      %v285 = vmul.f32 %v269, %v251
      %v286 = vmul.f32 %v270, %v252
      %v287 = vmul.f32 %v271, %v253
      %v288 = vmul.f32 %v272, %v254
      %v289 = vmul.f32 %v273, %v255
      %v290 = vmul.f32 %v274, %v256
      %v291 = vmul.f32 %v275, %v257
      %v292 = vmul.f32 %v276, %v258
      %v293 = vmul.f32 %v277, %v259
      %v294 = vmul.f32 %v278, %v260
      %v295 = vmul.f32 %v279, %v261
      %v296 = vmul.f32 %v280, %v262
      %v297 = vmul.f32 %v281, %v263
      %v299 = vlaneseq
      %v300 = vshrl.u32 %v299, 7
      %v301 = vsub.s32 0, %v300
      %v302 = vrot.slane %v264, %v301
      %v304 = vmul.f32 %v282, %v302
      %v305 = vmul.f32 %v283, %v302
      %v306 = vmul.f32 %v284, %v302
      %v307 = vmul.f32 %v285, %v302
      %v308 = vmul.f32 %v286, %v302
      %v309 = vmul.f32 %v287, %v302
      %v310 = vmul.f32 %v288, %v302
      %v311 = vmul.f32 %v289, %v302
      %v312 = vmul.f32 %v290, %v302
      %v313 = vmul.f32 %v291, %v302
      %v314 = vmul.f32 %v292, %v302
      %v315 = vmul.f32 %v293, %v302
      %v316 = vmul.f32 %v294, %v302
      %v317 = vmul.f32 %v295, %v302
      %v318 = vmul.f32 %v296, %v302
      %v319 = vmul.f32 %v297, %v302
      %v321 = vlaneseq
      %v322 = vshrl.u32 %v321, 7
      %v323 = vsub.s32 0, %v322
      %v324 = vrot.slane %v265, %v323
      %v326 = vadd.f32 %v304, %v324
      %v327 = vadd.f32 %v305, %v324
      %v328 = vadd.f32 %v306, %v324
      %v329 = vadd.f32 %v307, %v324
      %v330 = vadd.f32 %v308, %v324
      %v331 = vadd.f32 %v309, %v324
      %v332 = vadd.f32 %v310, %v324
      %v333 = vadd.f32 %v311, %v324
      %v334 = vadd.f32 %v312, %v324
      %v335 = vadd.f32 %v313, %v324
      %v336 = vadd.f32 %v314, %v324
      %v337 = vadd.f32 %v315, %v324
      %v338 = vadd.f32 %v316, %v324
      %v339 = vadd.f32 %v317, %v324
      %v340 = vadd.f32 %v318, %v324
      %v341 = vadd.f32 %v319, %v324
      %342 = vst [vmem:[#allocation2] sm:$0xff] %v326
      %343 = vst [vmem:[#allocation2 + $0x8] sm:$0xff] %v327
      %344 = vst [vmem:[#allocation2 + $0x10] sm:$0xff] %v328
      %345 = vst [vmem:[#allocation2 + $0x18] sm:$0xff] %v329
      %346 = vst [vmem:[#allocation2 + $0x20] sm:$0xff] %v330
      %347 = vst [vmem:[#allocation2 + $0x28] sm:$0xff] %v331
      %348 = vst [vmem:[#allocation2 + $0x30] sm:$0xff] %v332
      %349 = vst [vmem:[#allocation2 + $0x38] sm:$0xff] %v333
      %350 = vst [vmem:[#allocation2 + $0x40] sm:$0xff] %v334
      %351 = vst [vmem:[#allocation2 + $0x48] sm:$0xff] %v335
      %352 = vst [vmem:[#allocation2 + $0x50] sm:$0xff] %v336
      %353 = vst [vmem:[#allocation2 + $0x58] sm:$0xff] %v337
      %354 = vst [vmem:[#allocation2 + $0x60] sm:$0xff] %v338
      %355 = vst [vmem:[#allocation2 + $0x68] sm:$0xff] %v339
      %356 = vst [vmem:[#allocation2 + $0x70] sm:$0xff] %v340
      %357 = vst [vmem:[#allocation2 + $0x78] sm:$0xff] %v341
      %358 = vst [vmem:[#allocation3] sm:$0xff] 0.0
      %359 = vst [vmem:[#allocation3 + $0x8] sm:$0xff] 0.0
      %360 = vst [vmem:[#allocation3 + $0x10] sm:$0xff] 0.0
      %361 = vst [vmem:[#allocation3 + $0x18] sm:$0xff] 0.0
      %362 = vst [vmem:[#allocation3 + $0x20] sm:$0xff] 0.0
      %363 = vst [vmem:[#allocation3 + $0x28] sm:$0xff] 0.0
      %364 = vst [vmem:[#allocation3 + $0x30] sm:$0xff] 0.0
      %365 = vst [vmem:[#allocation3 + $0x38] sm:$0xff] 0.0
      %366 = vst [vmem:[#allocation3 + $0x40] sm:$0xff] 0.0
      %367 = vst [vmem:[#allocation3 + $0x48] sm:$0xff] 0.0
      %368 = vst [vmem:[#allocation3 + $0x50] sm:$0xff] 0.0
      %369 = vst [vmem:[#allocation3 + $0x58] sm:$0xff] 0.0
      %370 = vst [vmem:[#allocation3 + $0x60] sm:$0xff] 0.0
      %371 = vst [vmem:[#allocation3 + $0x68] sm:$0xff] 0.0
      %372 = vst [vmem:[#allocation3 + $0x70] sm:$0xff] 0.0
      %373 = vst [vmem:[#allocation3 + $0x78] sm:$0xff] 0.0
    $region45: #{tpu_custom_call.1} parent=1 // pred_fallthru
      _
    %v374 = vld [vmem:[#allocation2] sm:$0xff]
    %v375 = vld [vmem:[#allocation2 + $0x8] sm:$0xff]
    %v376 = vld [vmem:[#allocation2 + $0x10] sm:$0xff]
    %v377 = vld [vmem:[#allocation2 + $0x18] sm:$0xff]
    %v378 = vld [vmem:[#allocation2 + $0x20] sm:$0xff]
    %v379 = vld [vmem:[#allocation2 + $0x28] sm:$0xff]
    %v380 = vld [vmem:[#allocation2 + $0x30] sm:$0xff]
    %v381 = vld [vmem:[#allocation2 + $0x38] sm:$0xff]
    %v382 = vld [vmem:[#allocation2 + $0x40] sm:$0xff]
    %v383 = vld [vmem:[#allocation2 + $0x48] sm:$0xff]
    %v384 = vld [vmem:[#allocation2 + $0x50] sm:$0xff]
    %v385 = vld [vmem:[#allocation2 + $0x58] sm:$0xff]
    %v386 = vld [vmem:[#allocation2 + $0x60] sm:$0xff]
    %v387 = vld [vmem:[#allocation2 + $0x68] sm:$0xff]
    %v388 = vld [vmem:[#allocation2 + $0x70] sm:$0xff]
    %v389 = vld [vmem:[#allocation2 + $0x78] sm:$0xff]
    %v390 = vld [vmem:[#allocation7] sm:$0xff]
    %v391 = vld [vmem:[#allocation7 + $0x8] sm:$0xff]
    %v392 = vld [vmem:[#allocation7 + $0x10] sm:$0xff]
    %v393 = vld [vmem:[#allocation7 + $0x18] sm:$0xff]
    %v394 = vld [vmem:[#allocation7 + $0x20] sm:$0xff]
    %v395 = vld [vmem:[#allocation7 + $0x28] sm:$0xff]
    %v396 = vld [vmem:[#allocation7 + $0x30] sm:$0xff]
    %v397 = vld [vmem:[#allocation7 + $0x38] sm:$0xff]
    %v398 = vld [vmem:[#allocation7 + $0x40] sm:$0xff]
    %v399 = vld [vmem:[#allocation7 + $0x48] sm:$0xff]
    %v400 = vld [vmem:[#allocation7 + $0x50] sm:$0xff]
    %v401 = vld [vmem:[#allocation7 + $0x58] sm:$0xff]
    %v402 = vld [vmem:[#allocation7 + $0x60] sm:$0xff]
    %v403 = vld [vmem:[#allocation7 + $0x68] sm:$0xff]
    %v404 = vld [vmem:[#allocation7 + $0x70] sm:$0xff]
    %v405 = vld [vmem:[#allocation7 + $0x78] sm:$0xff]
    %v406 = vld [vmem:[#allocation7 + $0x80] sm:$0xff]
    %v407 = vld [vmem:[#allocation7 + $0x88] sm:$0xff]
    %v408 = vld [vmem:[#allocation7 + $0x90] sm:$0xff]
    %v409 = vld [vmem:[#allocation7 + $0x98] sm:$0xff]
    %v410 = vld [vmem:[#allocation7 + $0xa0] sm:$0xff]
    %v411 = vld [vmem:[#allocation7 + $0xa8] sm:$0xff]
    %v412 = vld [vmem:[#allocation7 + $0xb0] sm:$0xff]
    %v413 = vld [vmem:[#allocation7 + $0xb8] sm:$0xff]
    %v414 = vld [vmem:[#allocation7 + $0xc0] sm:$0xff]
    %v415 = vld [vmem:[#allocation7 + $0xc8] sm:$0xff]
    %v416 = vld [vmem:[#allocation7 + $0xd0] sm:$0xff]
    %v417 = vld [vmem:[#allocation7 + $0xd8] sm:$0xff]
    %v418 = vld [vmem:[#allocation7 + $0xe0] sm:$0xff]
    %v419 = vld [vmem:[#allocation7 + $0xe8] sm:$0xff]
    %v420 = vld [vmem:[#allocation7 + $0xf0] sm:$0xff]
    %v421 = vld [vmem:[#allocation7 + $0xf8] sm:$0xff]
    %v422 = vld [vmem:[%s2] sm:$0x3]
    %v424 = vlaneseq
    %v425 = vshrl.u32 %v424, 7
    %v426 = vsub.s32 0, %v425
    %v427 = vrot.slane %v422, %v426
    %v428 = vlaneseq
    %v429 = vshrl.u32 %v428, 7
    %v430 = vsub.s32 1, %v429
    %v431 = vrot.slane %v422, %v430
    %434 = vmatprep.subr.mxu0 %v421
    %435 = vmatpush1.msra.mxu0 %v420
    %436 = vmatprep.subr.mxu0 %v419
    %437 = vmatpush1.msra.mxu0 %v418
    %438 = vmatprep.subr.mxu0 %v417
    %439 = vmatpush1.msra.mxu0 %v416
    %440 = vmatprep.subr.mxu0 %v415
    %441 = vmatpush1.msra.mxu0 %v414
    %442 = vmatprep.subr.mxu0 %v413
    %443 = vmatpush1.msra.mxu0 %v412
    %444 = vmatprep.subr.mxu0 %v411
    %445 = vmatpush1.msra.mxu0 %v410
    %446 = vmatprep.subr.mxu0 %v409
    %447 = vmatpush1.msra.mxu0 %v408
    %448 = vmatprep.subr.mxu0 %v407
    %449 = vmatpush1.msra.mxu0 %v406
    %450 = vmatprep.subr.mxu0 %v405
    %451 = vmatpush1.msra.mxu0 %v404
    %452 = vmatprep.subr.mxu0 %v403
    %453 = vmatpush1.msra.mxu0 %v402
    %454 = vmatprep.subr.mxu0 %v401
    %455 = vmatpush1.msra.mxu0 %v400
    %456 = vmatprep.subr.mxu0 %v399
    %457 = vmatpush1.msra.mxu0 %v398
    %458 = vmatprep.subr.mxu0 %v397
    %459 = vmatpush1.msra.mxu0 %v396
    %460 = vmatprep.subr.mxu0 %v395
    %461 = vmatpush1.msra.mxu0 %v394
    %462 = vmatprep.subr.mxu0 %v393
    %463 = vmatpush1.msra.mxu0 %v392
    %464 = vmatprep.subr.mxu0 %v391
    %465 = vmatpush1.msra.mxu0 %v390
    %466 = vmatprep.subr.mxu0 0.0
    %467 = vmatpush2.msra.mxu0 0.0
    %468 = vmatprep.subr.mxu0 0.0
    %469 = vmatpush2.msra.mxu0 0.0
    %470 = vmatprep.subr.mxu0 0.0
    %471 = vmatpush2.msra.mxu0 0.0
    %472 = vmatprep.subr.mxu0 0.0
    %473 = vmatpush2.msra.mxu0 0.0
    %474 = vmatprep.subr.mxu0 0.0
    %475 = vmatpush2.msra.mxu0 0.0
    %476 = vmatprep.subr.mxu0 0.0
    %477 = vmatpush2.msra.mxu0 0.0
    %478 = vmatprep.subr.mxu0 0.0
    %479 = vmatpush2.msra.mxu0 0.0
    %480 = vmatprep.subr.mxu0 0.0
    %481 = vmatpush2.msra.mxu0 0.0
    %482 = vmatprep.subr.mxu0 0.0
    %483 = vmatpush2.msra.mxu0 0.0
    %484 = vmatprep.subr.mxu0 0.0
    %485 = vmatpush2.msra.mxu0 0.0
    %486 = vmatprep.subr.mxu0 0.0
    %487 = vmatpush2.msra.mxu0 0.0
    %488 = vmatprep.subr.mxu0 0.0
    %489 = vmatpush2.msra.mxu0 0.0
    %490 = vmatprep.subr.mxu0 0.0
    %491 = vmatpush2.msra.mxu0 0.0
    %492 = vmatprep.subr.mxu0 0.0
    %493 = vmatpush2.msra.mxu0 0.0
    %494 = vmatprep.subr.mxu0 0.0
    %495 = vmatpush2.msra.mxu0 0.0
    %496 = vmatprep.subr.mxu0 0.0
    %497 = vmatpush2.msra.mxu0 0.0
    %498 = vmatprep.mubr.f32.mxu0 0.0
    %499 = vmatmul.mubr.f32.gmra.mxu0 %v374
    %v500 = vpop.f32.mrf.mxu0
    %v501 = vadd.f32 %v427, %v500
    %v502 = vpop.f32.mrf.mxu0
    %v503 = vadd.f32 %v431, %v502
    %504 = vmatprep.mubr.f32.mxu0 0.0
    %505 = vmatmul.mubr.f32.gmra.mxu0 %v375
    %v506 = vpop.f32.mrf.mxu0
    %v507 = vadd.f32 %v427, %v506
    %v508 = vpop.f32.mrf.mxu0
    %v509 = vadd.f32 %v431, %v508
    %510 = vmatprep.mubr.f32.mxu0 0.0
    %511 = vmatmul.mubr.f32.gmra.mxu0 %v376
    %v512 = vpop.f32.mrf.mxu0
    %v513 = vadd.f32 %v427, %v512
    %v514 = vpop.f32.mrf.mxu0
    %v515 = vadd.f32 %v431, %v514
    %516 = vmatprep.mubr.f32.mxu0 0.0
    %517 = vmatmul.mubr.f32.gmra.mxu0 %v377
    %v518 = vpop.f32.mrf.mxu0
    %v519 = vadd.f32 %v427, %v518
    %v520 = vpop.f32.mrf.mxu0
    %v521 = vadd.f32 %v431, %v520
    %522 = vmatprep.mubr.f32.mxu0 0.0
    %523 = vmatmul.mubr.f32.gmra.mxu0 %v378
    %v524 = vpop.f32.mrf.mxu0
    %v525 = vadd.f32 %v427, %v524
    %v526 = vpop.f32.mrf.mxu0
    %v527 = vadd.f32 %v431, %v526
    %528 = vmatprep.mubr.f32.mxu0 0.0
    %529 = vmatmul.mubr.f32.gmra.mxu0 %v379
    %v530 = vpop.f32.mrf.mxu0
    %v531 = vadd.f32 %v427, %v530
    %v532 = vpop.f32.mrf.mxu0
    %v533 = vadd.f32 %v431, %v532
    %534 = vmatprep.mubr.f32.mxu0 0.0
    %535 = vmatmul.mubr.f32.gmra.mxu0 %v380
    %v536 = vpop.f32.mrf.mxu0
    %v537 = vadd.f32 %v427, %v536
    %v538 = vpop.f32.mrf.mxu0
    %v539 = vadd.f32 %v431, %v538
    %540 = vmatprep.mubr.f32.mxu0 0.0
    %541 = vmatmul.mubr.f32.gmra.mxu0 %v381
    %v542 = vpop.f32.mrf.mxu0
    %v543 = vadd.f32 %v427, %v542
    %v544 = vpop.f32.mrf.mxu0
    %v545 = vadd.f32 %v431, %v544
    %546 = vmatprep.mubr.f32.mxu0 0.0
    %547 = vmatmul.mubr.f32.gmra.mxu0 %v382
    %v548 = vpop.f32.mrf.mxu0
    %v549 = vadd.f32 %v427, %v548
    %v550 = vpop.f32.mrf.mxu0
    %v551 = vadd.f32 %v431, %v550
    %552 = vmatprep.mubr.f32.mxu0 0.0
    %553 = vmatmul.mubr.f32.gmra.mxu0 %v383
    %v554 = vpop.f32.mrf.mxu0
    %v555 = vadd.f32 %v427, %v554
    %v556 = vpop.f32.mrf.mxu0
    %v557 = vadd.f32 %v431, %v556
    %558 = vmatprep.mubr.f32.mxu0 0.0
    %559 = vmatmul.mubr.f32.gmra.mxu0 %v384
    %v560 = vpop.f32.mrf.mxu0
    %v561 = vadd.f32 %v427, %v560
    %v562 = vpop.f32.mrf.mxu0
    %v563 = vadd.f32 %v431, %v562
    %564 = vmatprep.mubr.f32.mxu0 0.0
    %565 = vmatmul.mubr.f32.gmra.mxu0 %v385
    %v566 = vpop.f32.mrf.mxu0
    %v567 = vadd.f32 %v427, %v566
    %v568 = vpop.f32.mrf.mxu0
    %v569 = vadd.f32 %v431, %v568
    %570 = vmatprep.mubr.f32.mxu0 0.0
    %571 = vmatmul.mubr.f32.gmra.mxu0 %v386
    %v572 = vpop.f32.mrf.mxu0
    %v573 = vadd.f32 %v427, %v572
    %v574 = vpop.f32.mrf.mxu0
    %v575 = vadd.f32 %v431, %v574
    %576 = vmatprep.mubr.f32.mxu0 0.0
    %577 = vmatmul.mubr.f32.gmra.mxu0 %v387
    %v578 = vpop.f32.mrf.mxu0
    %v579 = vadd.f32 %v427, %v578
    %v580 = vpop.f32.mrf.mxu0
    %v581 = vadd.f32 %v431, %v580
    %582 = vmatprep.mubr.f32.mxu0 0.0
    %583 = vmatmul.mubr.f32.gmra.mxu0 %v388
    %v584 = vpop.f32.mrf.mxu0
    %v585 = vadd.f32 %v427, %v584
    %v586 = vpop.f32.mrf.mxu0
    %v587 = vadd.f32 %v431, %v586
    %588 = vmatprep.mubr.f32.mxu0 0.0
    %589 = vmatmul.mubr.f32.gmra.mxu0 %v389
    %v590 = vpop.f32.mrf.mxu0
    %v591 = vadd.f32 %v427, %v590
    %v592 = vpop.f32.mrf.mxu0
    %v593 = vadd.f32 %v431, %v592
    %594 = vdwg.mxu0
    %v595 = vmul.f32 %v501, 0.5
    %v596 = vmul.f32 %v503, 0.5
    %v597 = vmul.f32 %v507, 0.5
    %v598 = vmul.f32 %v509, 0.5
    %v599 = vmul.f32 %v513, 0.5
    %v600 = vmul.f32 %v515, 0.5
    %v601 = vmul.f32 %v519, 0.5
    %v602 = vmul.f32 %v521, 0.5
    %v603 = vmul.f32 %v525, 0.5
    %v604 = vmul.f32 %v527, 0.5
    %v605 = vmul.f32 %v531, 0.5
    %v606 = vmul.f32 %v533, 0.5
    %v607 = vmul.f32 %v537, 0.5
    %v608 = vmul.f32 %v539, 0.5
    %v609 = vmul.f32 %v543, 0.5
    %v610 = vmul.f32 %v545, 0.5
    %v611 = vmul.f32 %v549, 0.5
    %v612 = vmul.f32 %v551, 0.5
    %v613 = vmul.f32 %v555, 0.5
    %v614 = vmul.f32 %v557, 0.5
    %v615 = vmul.f32 %v561, 0.5
    %v616 = vmul.f32 %v563, 0.5
    %v617 = vmul.f32 %v567, 0.5
    %v618 = vmul.f32 %v569, 0.5
    %v619 = vmul.f32 %v573, 0.5
    %v620 = vmul.f32 %v575, 0.5
    %v621 = vmul.f32 %v579, 0.5
    %v622 = vmul.f32 %v581, 0.5
    %v623 = vmul.f32 %v585, 0.5
    %v624 = vmul.f32 %v587, 0.5
    %v625 = vmul.f32 %v591, 0.5
    %v626 = vmul.f32 %v593, 0.5
    %v627 = vmul.f32 %v501, 0.70710677
    %v628 = vmul.f32 %v503, 0.70710677
    %v629 = vmul.f32 %v507, 0.70710677
    %v630 = vmul.f32 %v509, 0.70710677
    %v631 = vmul.f32 %v513, 0.70710677
    %v632 = vmul.f32 %v515, 0.70710677
    %v633 = vmul.f32 %v519, 0.70710677
    %v634 = vmul.f32 %v521, 0.70710677
    %v635 = vmul.f32 %v525, 0.70710677
    %v636 = vmul.f32 %v527, 0.70710677
    %v637 = vmul.f32 %v531, 0.70710677
    %v638 = vmul.f32 %v533, 0.70710677
    %v639 = vmul.f32 %v537, 0.70710677
    %v640 = vmul.f32 %v539, 0.70710677
    %v641 = vmul.f32 %v543, 0.70710677
    %v642 = vmul.f32 %v545, 0.70710677
    %v643 = vmul.f32 %v549, 0.70710677
    %v644 = vmul.f32 %v551, 0.70710677
    %v645 = vmul.f32 %v555, 0.70710677
    %v646 = vmul.f32 %v557, 0.70710677
    %v647 = vmul.f32 %v561, 0.70710677
    %v648 = vmul.f32 %v563, 0.70710677
    %v649 = vmul.f32 %v567, 0.70710677
    %v650 = vmul.f32 %v569, 0.70710677
    %v651 = vmul.f32 %v573, 0.70710677
    %v652 = vmul.f32 %v575, 0.70710677
    %v653 = vmul.f32 %v579, 0.70710677
    %v654 = vmul.f32 %v581, 0.70710677
    %v655 = vmul.f32 %v585, 0.70710677
    %v656 = vmul.f32 %v587, 0.70710677
    %v657 = vmul.f32 %v591, 0.70710677
    %v658 = vmul.f32 %v593, 0.70710677
    %v659 = verf.f32.pop %v627
    %v660 = verf.f32.pop %v628
    %v661 = verf.f32.pop %v629
    %v662 = verf.f32.pop %v630
    %v663 = verf.f32.pop %v631
    %v664 = verf.f32.pop %v632
    %v665 = verf.f32.pop %v633
    %v666 = verf.f32.pop %v634
    %v667 = verf.f32.pop %v635
    %v668 = verf.f32.pop %v636
    %v669 = verf.f32.pop %v637
    %v670 = verf.f32.pop %v638
    %v671 = verf.f32.pop %v639
    %v672 = verf.f32.pop %v640
    %v673 = verf.f32.pop %v641
    %v674 = verf.f32.pop %v642
    %v675 = verf.f32.pop %v643
    %v676 = verf.f32.pop %v644
    %v677 = verf.f32.pop %v645
    %v678 = verf.f32.pop %v646
    %v679 = verf.f32.pop %v647
    %v680 = verf.f32.pop %v648
    %v681 = verf.f32.pop %v649
    %v682 = verf.f32.pop %v650
    %v683 = verf.f32.pop %v651
    %v684 = verf.f32.pop %v652
    %v685 = verf.f32.pop %v653
    %v686 = verf.f32.pop %v654
    %v687 = verf.f32.pop %v655
    %v688 = verf.f32.pop %v656
    %v689 = verf.f32.pop %v657
    %v690 = verf.f32.pop %v658
    %v691 = vadd.f32 %v659, 1.0
    %v692 = vadd.f32 %v660, 1.0
    %v693 = vadd.f32 %v661, 1.0
    %v694 = vadd.f32 %v662, 1.0
    %v695 = vadd.f32 %v663, 1.0
    %v696 = vadd.f32 %v664, 1.0
    %v697 = vadd.f32 %v665, 1.0
    %v698 = vadd.f32 %v666, 1.0
    %v699 = vadd.f32 %v667, 1.0
    %v700 = vadd.f32 %v668, 1.0
    %v701 = vadd.f32 %v669, 1.0
    %v702 = vadd.f32 %v670, 1.0
    %v703 = vadd.f32 %v671, 1.0
    %v704 = vadd.f32 %v672, 1.0
    %v705 = vadd.f32 %v673, 1.0
    %v706 = vadd.f32 %v674, 1.0
    %v707 = vadd.f32 %v675, 1.0
    %v708 = vadd.f32 %v676, 1.0
    %v709 = vadd.f32 %v677, 1.0
    %v710 = vadd.f32 %v678, 1.0
    %v711 = vadd.f32 %v679, 1.0
    %v712 = vadd.f32 %v680, 1.0
    %v713 = vadd.f32 %v681, 1.0
    %v714 = vadd.f32 %v682, 1.0
    %v715 = vadd.f32 %v683, 1.0
    %v716 = vadd.f32 %v684, 1.0
    %v717 = vadd.f32 %v685, 1.0
    %v718 = vadd.f32 %v686, 1.0
    %v719 = vadd.f32 %v687, 1.0
    %v720 = vadd.f32 %v688, 1.0
    %v721 = vadd.f32 %v689, 1.0
    %v722 = vadd.f32 %v690, 1.0
    %v723 = vmul.f32 %v595, %v691
    %v724 = vmul.f32 %v596, %v692
    %v725 = vmul.f32 %v597, %v693
    %v726 = vmul.f32 %v598, %v694
    %v727 = vmul.f32 %v599, %v695
    %v728 = vmul.f32 %v600, %v696
    %v729 = vmul.f32 %v601, %v697
    %v730 = vmul.f32 %v602, %v698
    %v731 = vmul.f32 %v603, %v699
    %v732 = vmul.f32 %v604, %v700
    %v733 = vmul.f32 %v605, %v701
    %v734 = vmul.f32 %v606, %v702
    %v735 = vmul.f32 %v607, %v703
    %v736 = vmul.f32 %v608, %v704
    %v737 = vmul.f32 %v609, %v705
    %v738 = vmul.f32 %v610, %v706
    %v739 = vmul.f32 %v611, %v707
    %v740 = vmul.f32 %v612, %v708
    %v741 = vmul.f32 %v613, %v709
    %v742 = vmul.f32 %v614, %v710
    %v743 = vmul.f32 %v615, %v711
    %v744 = vmul.f32 %v616, %v712
    %v745 = vmul.f32 %v617, %v713
    %v746 = vmul.f32 %v618, %v714
    %v747 = vmul.f32 %v619, %v715
    %v748 = vmul.f32 %v620, %v716
    %v749 = vmul.f32 %v621, %v717
    %v750 = vmul.f32 %v622, %v718
    %v751 = vmul.f32 %v623, %v719
    %v752 = vmul.f32 %v624, %v720
    %v753 = vmul.f32 %v625, %v721
    %v754 = vmul.f32 %v626, %v722
    %v755 = vld [vmem:[#allocation3] sm:$0xff]
    %v756 = vld [vmem:[#allocation3 + $0x8] sm:$0xff]
    %v757 = vld [vmem:[#allocation3 + $0x10] sm:$0xff]
    %v758 = vld [vmem:[#allocation3 + $0x18] sm:$0xff]
    %v759 = vld [vmem:[#allocation3 + $0x20] sm:$0xff]
    %v760 = vld [vmem:[#allocation3 + $0x28] sm:$0xff]
    %v761 = vld [vmem:[#allocation3 + $0x30] sm:$0xff]
    %v762 = vld [vmem:[#allocation3 + $0x38] sm:$0xff]
    %v763 = vld [vmem:[#allocation3 + $0x40] sm:$0xff]
    %v764 = vld [vmem:[#allocation3 + $0x48] sm:$0xff]
    %v765 = vld [vmem:[#allocation3 + $0x50] sm:$0xff]
    %v766 = vld [vmem:[#allocation3 + $0x58] sm:$0xff]
    %v767 = vld [vmem:[#allocation3 + $0x60] sm:$0xff]
    %v768 = vld [vmem:[#allocation3 + $0x68] sm:$0xff]
    %v769 = vld [vmem:[#allocation3 + $0x70] sm:$0xff]
    %v770 = vld [vmem:[#allocation3 + $0x78] sm:$0xff]
    %v771 = vld [vmem:[#allocation9] sm:$0xff]
    %v772 = vld [vmem:[#allocation9 + $0x8] sm:$0xff]
    %v773 = vld [vmem:[#allocation9 + $0x10] sm:$0xff]
    %v774 = vld [vmem:[#allocation9 + $0x18] sm:$0xff]
    %v775 = vld [vmem:[#allocation9 + $0x20] sm:$0xff]
    %v776 = vld [vmem:[#allocation9 + $0x28] sm:$0xff]
    %v777 = vld [vmem:[#allocation9 + $0x30] sm:$0xff]
    %v778 = vld [vmem:[#allocation9 + $0x38] sm:$0xff]
    %v779 = vld [vmem:[#allocation9 + $0x40] sm:$0xff]
    %v780 = vld [vmem:[#allocation9 + $0x48] sm:$0xff]
    %v781 = vld [vmem:[#allocation9 + $0x50] sm:$0xff]
    %v782 = vld [vmem:[#allocation9 + $0x58] sm:$0xff]
    %v783 = vld [vmem:[#allocation9 + $0x60] sm:$0xff]
    %v784 = vld [vmem:[#allocation9 + $0x68] sm:$0xff]
    %v785 = vld [vmem:[#allocation9 + $0x70] sm:$0xff]
    %v786 = vld [vmem:[#allocation9 + $0x78] sm:$0xff]
    %v787 = vld [vmem:[#allocation9 + $0x80] sm:$0xff]
    %v788 = vld [vmem:[#allocation9 + $0x88] sm:$0xff]
    %v789 = vld [vmem:[#allocation9 + $0x90] sm:$0xff]
    %v790 = vld [vmem:[#allocation9 + $0x98] sm:$0xff]
    %v791 = vld [vmem:[#allocation9 + $0xa0] sm:$0xff]
    %v792 = vld [vmem:[#allocation9 + $0xa8] sm:$0xff]
    %v793 = vld [vmem:[#allocation9 + $0xb0] sm:$0xff]
    %v794 = vld [vmem:[#allocation9 + $0xb8] sm:$0xff]
    %v795 = vld [vmem:[#allocation9 + $0xc0] sm:$0xff]
    %v796 = vld [vmem:[#allocation9 + $0xc8] sm:$0xff]
    %v797 = vld [vmem:[#allocation9 + $0xd0] sm:$0xff]
    %v798 = vld [vmem:[#allocation9 + $0xd8] sm:$0xff]
    %v799 = vld [vmem:[#allocation9 + $0xe0] sm:$0xff]
    %v800 = vld [vmem:[#allocation9 + $0xe8] sm:$0xff]
    %v801 = vld [vmem:[#allocation9 + $0xf0] sm:$0xff]
    %v802 = vld [vmem:[#allocation9 + $0xf8] sm:$0xff]
    %803 = vmatprep.subr.mxu0 0.0
    %804 = vmatpush1.msra.mxu0 %v786
    %805 = vmatprep.subr.mxu0 0.0
    %806 = vmatpush1.msra.mxu0 %v785
    %807 = vmatprep.subr.mxu0 0.0
    %808 = vmatpush1.msra.mxu0 %v784
    %809 = vmatprep.subr.mxu0 0.0
    %810 = vmatpush1.msra.mxu0 %v783
    %811 = vmatprep.subr.mxu0 0.0
    %812 = vmatpush1.msra.mxu0 %v782
    %813 = vmatprep.subr.mxu0 0.0
    %814 = vmatpush1.msra.mxu0 %v781
    %815 = vmatprep.subr.mxu0 0.0
    %816 = vmatpush1.msra.mxu0 %v780
    %817 = vmatprep.subr.mxu0 0.0
    %818 = vmatpush1.msra.mxu0 %v779
    %819 = vmatprep.subr.mxu0 0.0
    %820 = vmatpush1.msra.mxu0 %v778
    %821 = vmatprep.subr.mxu0 0.0
    %822 = vmatpush1.msra.mxu0 %v777
    %823 = vmatprep.subr.mxu0 0.0
    %824 = vmatpush1.msra.mxu0 %v776
    %825 = vmatprep.subr.mxu0 0.0
    %826 = vmatpush1.msra.mxu0 %v775
    %827 = vmatprep.subr.mxu0 0.0
    %828 = vmatpush1.msra.mxu0 %v774
    %829 = vmatprep.subr.mxu0 0.0
    %830 = vmatpush1.msra.mxu0 %v773
    %831 = vmatprep.subr.mxu0 0.0
    %832 = vmatpush1.msra.mxu0 %v772
    %833 = vmatprep.subr.mxu0 0.0
    %834 = vmatpush1.msra.mxu0 %v771
    %835 = vmatprep.subr.mxu0 0.0
    %836 = vmatpush2.msra.mxu0 %v802
    %837 = vmatprep.subr.mxu0 0.0
    %838 = vmatpush2.msra.mxu0 %v801
    %839 = vmatprep.subr.mxu0 0.0
    %840 = vmatpush2.msra.mxu0 %v800
    %841 = vmatprep.subr.mxu0 0.0
    %842 = vmatpush2.msra.mxu0 %v799
    %843 = vmatprep.subr.mxu0 0.0
    %844 = vmatpush2.msra.mxu0 %v798
    %845 = vmatprep.subr.mxu0 0.0
    %846 = vmatpush2.msra.mxu0 %v797
    %847 = vmatprep.subr.mxu0 0.0
    %848 = vmatpush2.msra.mxu0 %v796
    %849 = vmatprep.subr.mxu0 0.0
    %850 = vmatpush2.msra.mxu0 %v795
    %851 = vmatprep.subr.mxu0 0.0
    %852 = vmatpush2.msra.mxu0 %v794
    %853 = vmatprep.subr.mxu0 0.0
    %854 = vmatpush2.msra.mxu0 %v793
    %855 = vmatprep.subr.mxu0 0.0
    %856 = vmatpush2.msra.mxu0 %v792
    %857 = vmatprep.subr.mxu0 0.0
    %858 = vmatpush2.msra.mxu0 %v791
    %859 = vmatprep.subr.mxu0 0.0
    %860 = vmatpush2.msra.mxu0 %v790
    %861 = vmatprep.subr.mxu0 0.0
    %862 = vmatpush2.msra.mxu0 %v789
    %863 = vmatprep.subr.mxu0 0.0
    %864 = vmatpush2.msra.mxu0 %v788
    %865 = vmatprep.subr.mxu0 0.0
    %866 = vmatpush2.msra.mxu0 %v787
    %867 = vmatprep.mubr.f32.mxu0 %v724
    %868 = vmatmul.mubr.f32.gmra.mxu0 %v723
    %v869 = vpop.f32.mrf.mxu0
    %v870 = vadd.f32 0.0, %v869
    %v871 = vpop.f32.mrf.mxu0
    %872 = vmatprep.mubr.f32.mxu0 %v726
    %873 = vmatmul.mubr.f32.gmra.mxu0 %v725
    %v874 = vpop.f32.mrf.mxu0
    %v875 = vadd.f32 0.0, %v874
    %v876 = vpop.f32.mrf.mxu0
    %877 = vmatprep.mubr.f32.mxu0 %v728
    %878 = vmatmul.mubr.f32.gmra.mxu0 %v727
    %v879 = vpop.f32.mrf.mxu0
    %v880 = vadd.f32 0.0, %v879
    %v881 = vpop.f32.mrf.mxu0
    %882 = vmatprep.mubr.f32.mxu0 %v730
    %883 = vmatmul.mubr.f32.gmra.mxu0 %v729
    %v884 = vpop.f32.mrf.mxu0
    %v885 = vadd.f32 0.0, %v884
    %v886 = vpop.f32.mrf.mxu0
    %887 = vmatprep.mubr.f32.mxu0 %v732
    %888 = vmatmul.mubr.f32.gmra.mxu0 %v731
    %v889 = vpop.f32.mrf.mxu0
    %v890 = vadd.f32 0.0, %v889
    %v891 = vpop.f32.mrf.mxu0
    %892 = vmatprep.mubr.f32.mxu0 %v734
    %893 = vmatmul.mubr.f32.gmra.mxu0 %v733
    %v894 = vpop.f32.mrf.mxu0
    %v895 = vadd.f32 0.0, %v894
    %v896 = vpop.f32.mrf.mxu0
    %897 = vmatprep.mubr.f32.mxu0 %v736
    %898 = vmatmul.mubr.f32.gmra.mxu0 %v735
    %v899 = vpop.f32.mrf.mxu0
    %v900 = vadd.f32 0.0, %v899
    %v901 = vpop.f32.mrf.mxu0
    %902 = vmatprep.mubr.f32.mxu0 %v738
    %903 = vmatmul.mubr.f32.gmra.mxu0 %v737
    %v904 = vpop.f32.mrf.mxu0
    %v905 = vadd.f32 0.0, %v904
    %v906 = vpop.f32.mrf.mxu0
    %907 = vmatprep.mubr.f32.mxu0 %v740
    %908 = vmatmul.mubr.f32.gmra.mxu0 %v739
    %v909 = vpop.f32.mrf.mxu0
    %v910 = vadd.f32 0.0, %v909
    %v911 = vpop.f32.mrf.mxu0
    %912 = vmatprep.mubr.f32.mxu0 %v742
    %913 = vmatmul.mubr.f32.gmra.mxu0 %v741
    %v914 = vpop.f32.mrf.mxu0
    %v915 = vadd.f32 0.0, %v914
    %v916 = vpop.f32.mrf.mxu0
    %917 = vmatprep.mubr.f32.mxu0 %v744
    %918 = vmatmul.mubr.f32.gmra.mxu0 %v743
    %v919 = vpop.f32.mrf.mxu0
    %v920 = vadd.f32 0.0, %v919
    %v921 = vpop.f32.mrf.mxu0
    %922 = vmatprep.mubr.f32.mxu0 %v746
    %923 = vmatmul.mubr.f32.gmra.mxu0 %v745
    %v924 = vpop.f32.mrf.mxu0
    %v925 = vadd.f32 0.0, %v924
    %v926 = vpop.f32.mrf.mxu0
    %927 = vmatprep.mubr.f32.mxu0 %v748
    %928 = vmatmul.mubr.f32.gmra.mxu0 %v747
    %v929 = vpop.f32.mrf.mxu0
    %v930 = vadd.f32 0.0, %v929
    %v931 = vpop.f32.mrf.mxu0
    %932 = vmatprep.mubr.f32.mxu0 %v750
    %933 = vmatmul.mubr.f32.gmra.mxu0 %v749
    %v934 = vpop.f32.mrf.mxu0
    %v935 = vadd.f32 0.0, %v934
    %v936 = vpop.f32.mrf.mxu0
    %937 = vmatprep.mubr.f32.mxu0 %v752
    %938 = vmatmul.mubr.f32.gmra.mxu0 %v751
    %v939 = vpop.f32.mrf.mxu0
    %v940 = vadd.f32 0.0, %v939
    %v941 = vpop.f32.mrf.mxu0
    %942 = vmatprep.mubr.f32.mxu0 %v754
    %943 = vmatmul.mubr.f32.gmra.mxu0 %v753
    %v944 = vpop.f32.mrf.mxu0
    %v945 = vadd.f32 0.0, %v944
    %v946 = vpop.f32.mrf.mxu0
    %947 = vdwg.mxu0
    %v948 = vadd.f32 %v755, %v870
    %v949 = vadd.f32 %v756, %v875
    %v950 = vadd.f32 %v757, %v880
    %v951 = vadd.f32 %v758, %v885
    %v952 = vadd.f32 %v759, %v890
    %v953 = vadd.f32 %v760, %v895
    %v954 = vadd.f32 %v761, %v900
    %v955 = vadd.f32 %v762, %v905
    %v956 = vadd.f32 %v763, %v910
    %v957 = vadd.f32 %v764, %v915
    %v958 = vadd.f32 %v765, %v920
    %v959 = vadd.f32 %v766, %v925
    %v960 = vadd.f32 %v767, %v930
    %v961 = vadd.f32 %v768, %v935
    %v962 = vadd.f32 %v769, %v940
    %v963 = vadd.f32 %v770, %v945
    %964 = vst [vmem:[#allocation3] sm:$0xff] %v948
    %965 = vst [vmem:[#allocation3 + $0x8] sm:$0xff] %v949
    %966 = vst [vmem:[#allocation3 + $0x10] sm:$0xff] %v950
    %967 = vst [vmem:[#allocation3 + $0x18] sm:$0xff] %v951
    %968 = vst [vmem:[#allocation3 + $0x20] sm:$0xff] %v952
    %969 = vst [vmem:[#allocation3 + $0x28] sm:$0xff] %v953
    %970 = vst [vmem:[#allocation3 + $0x30] sm:$0xff] %v954
    %971 = vst [vmem:[#allocation3 + $0x38] sm:$0xff] %v955
    %972 = vst [vmem:[#allocation3 + $0x40] sm:$0xff] %v956
    %973 = vst [vmem:[#allocation3 + $0x48] sm:$0xff] %v957
    %974 = vst [vmem:[#allocation3 + $0x50] sm:$0xff] %v958
    %975 = vst [vmem:[#allocation3 + $0x58] sm:$0xff] %v959
    %976 = vst [vmem:[#allocation3 + $0x60] sm:$0xff] %v960
    %977 = vst [vmem:[#allocation3 + $0x68] sm:$0xff] %v961
    %978 = vst [vmem:[#allocation3 + $0x70] sm:$0xff] %v962
    %979 = vst [vmem:[#allocation3 + $0x78] sm:$0xff] %v963
    // Predicated region
    $region46: #{tpu_custom_call.1} parent=1 // pred_check
      %p980 = pneg %p68
    $region47: #{tpu_custom_call.1} parent=1 // pred_check_branch
      %982 = sbr.rel (%p980) target = $region49
    $region48: #{tpu_custom_call.1} parent=1 // pred_region
      %v983 = vld [vmem:[#allocation3] sm:$0xff]
      %v984 = vld [vmem:[#allocation3 + $0x8] sm:$0xff]
      %v985 = vld [vmem:[#allocation3 + $0x10] sm:$0xff]
      %v986 = vld [vmem:[#allocation3 + $0x18] sm:$0xff]
      %v987 = vld [vmem:[#allocation3 + $0x20] sm:$0xff]
      %v988 = vld [vmem:[#allocation3 + $0x28] sm:$0xff]
      %v989 = vld [vmem:[#allocation3 + $0x30] sm:$0xff]
      %v990 = vld [vmem:[#allocation3 + $0x38] sm:$0xff]
      %v991 = vld [vmem:[#allocation3 + $0x40] sm:$0xff]
      %v992 = vld [vmem:[#allocation3 + $0x48] sm:$0xff]
      %v993 = vld [vmem:[#allocation3 + $0x50] sm:$0xff]
      %v994 = vld [vmem:[#allocation3 + $0x58] sm:$0xff]
      %v995 = vld [vmem:[#allocation3 + $0x60] sm:$0xff]
      %v996 = vld [vmem:[#allocation3 + $0x68] sm:$0xff]
      %v997 = vld [vmem:[#allocation3 + $0x70] sm:$0xff]
      %v998 = vld [vmem:[#allocation3 + $0x78] sm:$0xff]
      %v999 = vld [vmem:[%s4] sm:$0x1]
      %v1001 = vlaneseq
      %v1002 = vshrl.u32 %v1001, 7
      %v1003 = vsub.s32 0, %v1002
      %v1004 = vrot.slane %v999, %v1003
      %v1006 = vadd.f32 %v983, %v1004
      %v1007 = vadd.f32 %v984, %v1004
      %v1008 = vadd.f32 %v985, %v1004
      %v1009 = vadd.f32 %v986, %v1004
      %v1010 = vadd.f32 %v987, %v1004
      %v1011 = vadd.f32 %v988, %v1004
      %v1012 = vadd.f32 %v989, %v1004
      %v1013 = vadd.f32 %v990, %v1004
      %v1014 = vadd.f32 %v991, %v1004
      %v1015 = vadd.f32 %v992, %v1004
      %v1016 = vadd.f32 %v993, %v1004
      %v1017 = vadd.f32 %v994, %v1004
      %v1018 = vadd.f32 %v995, %v1004
      %v1019 = vadd.f32 %v996, %v1004
      %v1020 = vadd.f32 %v997, %v1004
      %v1021 = vadd.f32 %v998, %v1004
      %v1022 = vld [vmem:[#allocation4] sm:$0xff]
      %v1023 = vld [vmem:[#allocation4 + $0x8] sm:$0xff]
      %v1024 = vld [vmem:[#allocation4 + $0x10] sm:$0xff]
      %v1025 = vld [vmem:[#allocation4 + $0x18] sm:$0xff]
      %v1026 = vld [vmem:[#allocation4 + $0x20] sm:$0xff]
      %v1027 = vld [vmem:[#allocation4 + $0x28] sm:$0xff]
      %v1028 = vld [vmem:[#allocation4 + $0x30] sm:$0xff]
      %v1029 = vld [vmem:[#allocation4 + $0x38] sm:$0xff]
      %v1030 = vld [vmem:[#allocation4 + $0x40] sm:$0xff]
      %v1031 = vld [vmem:[#allocation4 + $0x48] sm:$0xff]
      %v1032 = vld [vmem:[#allocation4 + $0x50] sm:$0xff]
      %v1033 = vld [vmem:[#allocation4 + $0x58] sm:$0xff]
      %v1034 = vld [vmem:[#allocation4 + $0x60] sm:$0xff]
      %v1035 = vld [vmem:[#allocation4 + $0x68] sm:$0xff]
      %v1036 = vld [vmem:[#allocation4 + $0x70] sm:$0xff]
      %v1037 = vld [vmem:[#allocation4 + $0x78] sm:$0xff]
      %v1038 = vadd.f32 %v1006, %v1022
      %v1039 = vadd.f32 %v1007, %v1023
      %v1040 = vadd.f32 %v1008, %v1024
      %v1041 = vadd.f32 %v1009, %v1025
      %v1042 = vadd.f32 %v1010, %v1026
      %v1043 = vadd.f32 %v1011, %v1027
      %v1044 = vadd.f32 %v1012, %v1028
      %v1045 = vadd.f32 %v1013, %v1029
      %v1046 = vadd.f32 %v1014, %v1030
      %v1047 = vadd.f32 %v1015, %v1031
      %v1048 = vadd.f32 %v1016, %v1032
      %v1049 = vadd.f32 %v1017, %v1033
      %v1050 = vadd.f32 %v1018, %v1034
      %v1051 = vadd.f32 %v1019, %v1035
      %v1052 = vadd.f32 %v1020, %v1036
      %v1053 = vadd.f32 %v1021, %v1037
      %1054 = vst [vmem:[#allocation10] sm:$0xff] %v1038
      %1055 = vst [vmem:[#allocation10 + $0x8] sm:$0xff] %v1039
      %1056 = vst [vmem:[#allocation10 + $0x10] sm:$0xff] %v1040
      %1057 = vst [vmem:[#allocation10 + $0x18] sm:$0xff] %v1041
      %1058 = vst [vmem:[#allocation10 + $0x20] sm:$0xff] %v1042
      %1059 = vst [vmem:[#allocation10 + $0x28] sm:$0xff] %v1043
      %1060 = vst [vmem:[#allocation10 + $0x30] sm:$0xff] %v1044
      %1061 = vst [vmem:[#allocation10 + $0x38] sm:$0xff] %v1045
      %1062 = vst [vmem:[#allocation10 + $0x40] sm:$0xff] %v1046
      %1063 = vst [vmem:[#allocation10 + $0x48] sm:$0xff] %v1047
      %1064 = vst [vmem:[#allocation10 + $0x50] sm:$0xff] %v1048
      %1065 = vst [vmem:[#allocation10 + $0x58] sm:$0xff] %v1049
      %1066 = vst [vmem:[#allocation10 + $0x60] sm:$0xff] %v1050
      %1067 = vst [vmem:[#allocation10 + $0x68] sm:$0xff] %v1051
      %1068 = vst [vmem:[#allocation10 + $0x70] sm:$0xff] %v1052
      %1069 = vst [vmem:[#allocation10 + $0x78] sm:$0xff] %v1053
    $region49: #{tpu_custom_call.1} parent=1 // pred_fallthru
      _
    // Predicated region
    $region50: #{tpu_custom_call.1} parent=1 // pred_check
      _
    $region51: #{tpu_custom_call.1} parent=1 // pred_check_branch
      %1071 = sbr.rel (0) target = $region53
    $region52: #{tpu_custom_call.1} parent=1 // pred_region
      %s1073 = ssub.s32 2048, 2048
      %1074 = vsyncadd [#allocation6], %s1073
      %s1075 = sshll.u32 [#allocation10], 4
      %s1076 = int_to_ptr.vmem [resolvable:$true] %s1075
      %1081 = dma.vmem_to_hbm [thread:$0]  %s1076, 2048, %s7, [#allocation6], 128, 128, 8
    $region53: #{tpu_custom_call.1} parent=1 // pred_fallthru
      _
    // Predicated region
    $region54: #{tpu_custom_call.1} parent=1 // pred_check
      _
    $region55: #{tpu_custom_call.1} parent=1 // pred_check_branch
      %1083 = sbr.rel (0) target = $region57
    $region56: #{tpu_custom_call.1} parent=1 // pred_region
      %1084 = dma.done [#allocation6], 2048
    $region57: #{tpu_custom_call.1} parent=1 // pred_fallthru
      _
    %1085 = vsyncpa [#allocation5], 1
    %1086 = vsyncpa [#allocation8], 1
    %1087 = vsyncpa [#allocation6], 1

</llo_original>
